<compile_context>
chip_gen: v5e
topology: v5e:2x2
jax: 0.10.0
libtpu: 0.0.40
codegen_flags: <defaults>
</compile_context>

<pallas_src>
import jax
import jax.numpy as jnp
from jax.experimental import pallas as pl
from jax.experimental.pallas import tpu as pltpu

_LANES = 128          # TPU lane width
_COLS_MAX = 1024      # widest lane-dense slab width we try (multiple of 128)
_TILE_ROWS = 1024     # 1024 x 1024 x 4 B = 4 MiB per f32 block
_SMALL_N = 64 * 1024  # below this, plain XLA elementwise wins


def _ste_kernel(x_ref, o_ref):
    # Elementwise hot path: strictly-greater-than-zero mask, cast to f32.
    o_ref[...] = (x_ref[...] > 0).astype(jnp.float32)


def ste_forward(x: jax.Array) -> jax.Array:
    """Forward of the STE module: (x > 0).float(), any-shape input."""
    orig_shape = x.shape
    n = int(x.size)
    if n == 0:
        return jnp.zeros(orig_shape, jnp.float32)

    # Fast path: tiny inputs, or element counts that do not flatten into a
    # lane-dense (rows, k*128) slab without padding.  XLA's fused elementwise
    # compare+cast is already at the HBM roofline for these; going through the
    # kernel would only add launch overhead / extra HBM passes.
    # TODO(synk): for huge n with n % 128 != 0, a kernel-on-bulk + tiny-XLA-
    #   tail split is possible but needs an extra combine pass; skipped.
    if n < _SMALL_N or n % _LANES != 0:
        return (x > 0).astype(jnp.float32)

    # Widest lane-dense column count (multiple of 128) that divides n exactly,
    # so the flatten/unflatten reshapes stay free (no pad, no slice).
    cols = _COLS_MAX
    while n % cols != 0:
        cols //= 2
    rows = n // cols

    # Near-equal row blocks of ~4 MiB f32.  Even block count when >1 so both
    # v7x TensorCores get balanced work; single block otherwise (v5e/v6e are
    # single-TC, extra grid steps are pure overhead for a streaming kernel).
    target_rows = max(8, (_TILE_ROWS * _COLS_MAX) // cols)
    num_blocks = pl.cdiv(rows, target_rows)
    if num_blocks > 1 and num_blocks % 2 != 0:
        num_blocks += 1
    tile_r = min(rows, ((pl.cdiv(rows, num_blocks) + 7) // 8) * 8)
    grid = (pl.cdiv(rows, tile_r),)  # ragged last block handled by Pallas

    x2d = x.reshape(rows, cols)  # pure metadata reshape (contiguous layout)

    out2d = pl.pallas_call(
        _ste_kernel,
        out_shape=jax.ShapeDtypeStruct((rows, cols), jnp.float32),
        grid_spec=pltpu.PrefetchScalarGridSpec(
            num_scalar_prefetch=0,
            grid=grid,
            in_specs=[pl.BlockSpec((tile_r, cols), lambda i: (i, 0))],
            out_specs=pl.BlockSpec((tile_r, cols), lambda i: (i, 0)),
        ),
        compiler_params=pltpu.CompilerParams(
            dimension_semantics=("parallel",),
            # ~16 MiB actually used at the largest block size; explicit limit
            # with headroom, safe on v5e/v6e (128 MiB) and v7x (64 MiB).
            vmem_limit_bytes=40 << 20,
        ),
    )(x2d)

    return out2d.reshape(orig_shape)  # free reshape, no slice needed


if __name__ == "__main__":
    key = jax.random.PRNGKey(0)

    # 1) Module-scale demo input (NCHW, batch=2, channels=4, spatial=16x16).
    #    This is 2048 elements -> takes the small-input fast path by design.
    x_small = jax.random.normal(key, (2, 4, 16, 16), dtype=jnp.float32)
    y_small = ste_forward(x_small)
    jax.block_until_ready(y_small)
    assert y_small.shape == x_small.shape and y_small.dtype == jnp.float32
    assert bool(jnp.all(y_small == (x_small > 0).astype(jnp.float32)))

    # 2) Larger input that exercises the Pallas kernel (single-block path).
    x_big = jax.random.normal(jax.random.PRNGKey(1), (8, 32, 32, 32),
                              dtype=jnp.float32)
    y_big = ste_forward(x_big)
    jax.block_until_ready(y_big)
    assert bool(jnp.all(y_big == (x_big > 0).astype(jnp.float32)))

    # 3) Multi-block ragged-edge path (rows not divisible by tile_r): checks
    #    that OOB writes of the last block are masked correctly.
    x_ragged = jax.random.normal(jax.random.PRNGKey(2), (1100, 1024),
                                 dtype=jnp.float32)
    y_ragged = ste_forward(x_ragged)
    jax.block_until_ready(y_ragged)
    assert bool(jnp.all(y_ragged == (x_ragged > 0).astype(jnp.float32)))

    # 4) Awkward shape (element count not a multiple of 128) -> XLA fallback.
    x_odd = jax.random.normal(jax.random.PRNGKey(3), (3, 5, 7, 11),
                              dtype=jnp.float32)
    y_odd = ste_forward(x_odd)
    jax.block_until_ready(y_odd)
    assert bool(jnp.all(y_odd == (x_odd > 0).astype(jnp.float32)))

    print("KERNEL_OK")
</pallas_src>

<mosaic_0001>
module attributes {stable_mosaic.version = 11 : i64} {
  func.func @_ste_kernel(%arg0: i32, %arg1: memref<256x1024xf32, #tpu.memory_space<vmem>>, %arg2: memref<256x1024xf32, #tpu.memory_space<vmem>>) attributes {dimension_semantics = [#tpu.dimension_semantics<parallel>], iteration_bounds = array<i64: 1>, scalar_prefetch = 0 : i64, scratch_operands = 0 : i64, tpu.core_type = #tpu.core_type<tc>, window_params = [{transform_indices = @transform_0, window_bounds = array<i64: 256, 1024>}, {transform_indices = @transform_1, window_bounds = array<i64: 256, 1024>}]} {
    %c0 = arith.constant 0 : index
    %c0_0 = arith.constant 0 : index
    %0 = vector.load %arg1[%c0, %c0_0] : memref<256x1024xf32, #tpu.memory_space<vmem>>, vector<256x1024xf32>
    %cst = arith.constant 0.000000e+00 : f32
    %1 = vector.broadcast %cst : f32 to vector<256x1024xf32>
    %2 = arith.cmpf ogt, %0, %1 : vector<256x1024xf32>
    %3 = arith.extui %2 : vector<256x1024xi1> to vector<256x1024xi32>
    %4 = arith.sitofp %3 : vector<256x1024xi32> to vector<256x1024xf32>
    %c0_1 = arith.constant 0 : index
    %c0_2 = arith.constant 0 : index
    %5 = vector.load %arg2[%c0_1, %c0_2] : memref<256x1024xf32, #tpu.memory_space<vmem>>, vector<256x1024xf32>
    tpu.vector_store %arg2[%c0_1, %c0_2], %4 {strides = array<i32>} : memref<256x1024xf32, #tpu.memory_space<vmem>>, vector<256x1024xf32>,
    return
  }
  func.func @transform_0(%arg0: i32) -> (i32, i32) {
    %c0_i32 = arith.constant 0 : i32
    %c0_i32_0 = arith.constant 0 : i32
    return %arg0, %c0_i32 : i32, i32
  }
  func.func @transform_1(%arg0: i32) -> (i32, i32) {
    %c0_i32 = arith.constant 0 : i32
    %c0_i32_0 = arith.constant 0 : i32
    return %arg0, %c0_i32 : i32, i32
  }
}

</mosaic_0001>

<llo_original>
// kernel: tpu_custom_call.1
$region0: #{tpu_custom_call.1}
  #allocation0 [shape = 'u32[]', space=smem, size = 0x4, offset = 0x4, fixed_abs, tag = 'smem constant byte address 0x4 - core index']
  #allocation1 [shape = 'u32[72,128]{1,0:T(1,128)}', space=vmem, size = 0x9000, scoped, tag = 'internal scratch']
  %s0 = inlined_call_operand.hbm [shape: f32[256,1024], index: 0, kind: input, shape index: {}]
  %s1 = inlined_call_operand.hbm [shape: f32[256,1024], index: 1, kind: output, shape index: {}]
  %s2 = sld [smem:[#allocation0]]
  $region18: #{tpu_custom_call.1} parent=0
    _
  %s4 = ssub.s32 1, %s2
  %s5 = scalar_select 0, %s4, %s2
  $region1: #{tpu_custom_call.1} parent=0
    #allocation2 [shape = 'u8[1048576]{0}', space=vmem, size = 0x100000, scoped, tag = 'input window, operand 0, single buffered']
    #allocation3 [shape = 's32[1]{0}', space=sflag, size = 0x4, scoped, tag = 'scoped memory for tpu_custom_call.1']
    #allocation4 [shape = 's32[1]{0}', space=sflag, size = 0x4, scoped, tag = 'scoped memory for tpu_custom_call.1']
    #allocation5 [shape = 'u8[1048576]{0}', space=vmem, size = 0x100000, scoped, tag = 'output window, operand 0, single buffered']
    %6 = vsyncpa [#allocation3], 0
    %7 = vsyncpa [#allocation4], 0
    // Predicated region
    $region2: #{tpu_custom_call.1} parent=1 // pred_check
      _
    $region3: #{tpu_custom_call.1} parent=1 // pred_check_branch
      %9 = sbr.rel (0) target = $region5
    $region4: #{tpu_custom_call.1} parent=1 // pred_region
      %11 = vsyncadd [#allocation3], 0
      %s12 = sshll.u32 %s0, 4
      %s13 = int_to_ptr.hbm [resolvable:$true] %s12
      %s14 = sshll.u32 [#allocation2], 4
      %s15 = int_to_ptr.vmem [resolvable:$true] %s14
      %20 = dma.hbm_to_vmem [thread:$0]  %s13, 32768, %s15, [#allocation3], 1024, 1024, 64
    $region5: #{tpu_custom_call.1} parent=1 // pred_fallthru
      _
    // Predicated region
    $region6: #{tpu_custom_call.1} parent=1 // pred_check
      _
    $region7: #{tpu_custom_call.1} parent=1 // pred_check_branch
      %22 = sbr.rel (0) target = $region9
    $region8: #{tpu_custom_call.1} parent=1 // pred_region
      %24 = dma.done [#allocation3], 32768
    $region9: #{tpu_custom_call.1} parent=1 // pred_fallthru
      _
    %v25 = vld [vmem:[#allocation2] sm:$0xff]
    %v26 = vld [vmem:[#allocation2 + $0x8] sm:$0xff]
    %v27 = vld [vmem:[#allocation2 + $0x10] sm:$0xff]
    %v28 = vld [vmem:[#allocation2 + $0x18] sm:$0xff]
    %v29 = vld [vmem:[#allocation2 + $0x20] sm:$0xff]
    %v30 = vld [vmem:[#allocation2 + $0x28] sm:$0xff]
    %v31 = vld [vmem:[#allocation2 + $0x30] sm:$0xff]
    %v32 = vld [vmem:[#allocation2 + $0x38] sm:$0xff]
    %v33 = vld [vmem:[#allocation2 + $0x40] sm:$0xff]
    %v34 = vld [vmem:[#allocation2 + $0x48] sm:$0xff]
    %v35 = vld [vmem:[#allocation2 + $0x50] sm:$0xff]
    %v36 = vld [vmem:[#allocation2 + $0x58] sm:$0xff]
    %v37 = vld [vmem:[#allocation2 + $0x60] sm:$0xff]
    %v38 = vld [vmem:[#allocation2 + $0x68] sm:$0xff]
    %v39 = vld [vmem:[#allocation2 + $0x70] sm:$0xff]
    %v40 = vld [vmem:[#allocation2 + $0x78] sm:$0xff]
    %v41 = vld [vmem:[#allocation2 + $0x80] sm:$0xff]
    %v42 = vld [vmem:[#allocation2 + $0x88] sm:$0xff]
    %v43 = vld [vmem:[#allocation2 + $0x90] sm:$0xff]
    %v44 = vld [vmem:[#allocation2 + $0x98] sm:$0xff]
    %v45 = vld [vmem:[#allocation2 + $0xa0] sm:$0xff]
    %v46 = vld [vmem:[#allocation2 + $0xa8] sm:$0xff]
    %v47 = vld [vmem:[#allocation2 + $0xb0] sm:$0xff]
    %v48 = vld [vmem:[#allocation2 + $0xb8] sm:$0xff]
    %v49 = vld [vmem:[#allocation2 + $0xc0] sm:$0xff]
    %v50 = vld [vmem:[#allocation2 + $0xc8] sm:$0xff]
    %v51 = vld [vmem:[#allocation2 + $0xd0] sm:$0xff]
    %v52 = vld [vmem:[#allocation2 + $0xd8] sm:$0xff]
    %v53 = vld [vmem:[#allocation2 + $0xe0] sm:$0xff]
    %v54 = vld [vmem:[#allocation2 + $0xe8] sm:$0xff]
    %v55 = vld [vmem:[#allocation2 + $0xf0] sm:$0xff]
    %v56 = vld [vmem:[#allocation2 + $0xf8] sm:$0xff]
    %v57 = vld [vmem:[#allocation2 + $0x100] sm:$0xff]
    %v58 = vld [vmem:[#allocation2 + $0x108] sm:$0xff]
    %v59 = vld [vmem:[#allocation2 + $0x110] sm:$0xff]
    %v60 = vld [vmem:[#allocation2 + $0x118] sm:$0xff]
    %v61 = vld [vmem:[#allocation2 + $0x120] sm:$0xff]
    %v62 = vld [vmem:[#allocation2 + $0x128] sm:$0xff]
    %v63 = vld [vmem:[#allocation2 + $0x130] sm:$0xff]
    %v64 = vld [vmem:[#allocation2 + $0x138] sm:$0xff]
    %v65 = vld [vmem:[#allocation2 + $0x140] sm:$0xff]
    %v66 = vld [vmem:[#allocation2 + $0x148] sm:$0xff]
    %v67 = vld [vmem:[#allocation2 + $0x150] sm:$0xff]
    %v68 = vld [vmem:[#allocation2 + $0x158] sm:$0xff]
    %v69 = vld [vmem:[#allocation2 + $0x160] sm:$0xff]
    %v70 = vld [vmem:[#allocation2 + $0x168] sm:$0xff]
    %v71 = vld [vmem:[#allocation2 + $0x170] sm:$0xff]
    %v72 = vld [vmem:[#allocation2 + $0x178] sm:$0xff]
    %v73 = vld [vmem:[#allocation2 + $0x180] sm:$0xff]
    %v74 = vld [vmem:[#allocation2 + $0x188] sm:$0xff]
    %v75 = vld [vmem:[#allocation2 + $0x190] sm:$0xff]
    %v76 = vld [vmem:[#allocation2 + $0x198] sm:$0xff]
    %v77 = vld [vmem:[#allocation2 + $0x1a0] sm:$0xff]
    %v78 = vld [vmem:[#allocation2 + $0x1a8] sm:$0xff]
    %v79 = vld [vmem:[#allocation2 + $0x1b0] sm:$0xff]
    %v80 = vld [vmem:[#allocation2 + $0x1b8] sm:$0xff]
    %v81 = vld [vmem:[#allocation2 + $0x1c0] sm:$0xff]
    %v82 = vld [vmem:[#allocation2 + $0x1c8] sm:$0xff]
    %v83 = vld [vmem:[#allocation2 + $0x1d0] sm:$0xff]
    %v84 = vld [vmem:[#allocation2 + $0x1d8] sm:$0xff]
    %v85 = vld [vmem:[#allocation2 + $0x1e0] sm:$0xff]
    %v86 = vld [vmem:[#allocation2 + $0x1e8] sm:$0xff]
    %v87 = vld [vmem:[#allocation2 + $0x1f0] sm:$0xff]
    %v88 = vld [vmem:[#allocation2 + $0x1f8] sm:$0xff]
    %v89 = vld [vmem:[#allocation2 + $0x200] sm:$0xff]
    %v90 = vld [vmem:[#allocation2 + $0x208] sm:$0xff]
    %v91 = vld [vmem:[#allocation2 + $0x210] sm:$0xff]
    %v92 = vld [vmem:[#allocation2 + $0x218] sm:$0xff]
    %v93 = vld [vmem:[#allocation2 + $0x220] sm:$0xff]
    %v94 = vld [vmem:[#allocation2 + $0x228] sm:$0xff]
    %v95 = vld [vmem:[#allocation2 + $0x230] sm:$0xff]
    %v96 = vld [vmem:[#allocation2 + $0x238] sm:$0xff]
    %v97 = vld [vmem:[#allocation2 + $0x240] sm:$0xff]
    %v98 = vld [vmem:[#allocation2 + $0x248] sm:$0xff]
    %v99 = vld [vmem:[#allocation2 + $0x250] sm:$0xff]
    %v100 = vld [vmem:[#allocation2 + $0x258] sm:$0xff]
    %v101 = vld [vmem:[#allocation2 + $0x260] sm:$0xff]
    %v102 = vld [vmem:[#allocation2 + $0x268] sm:$0xff]
    %v103 = vld [vmem:[#allocation2 + $0x270] sm:$0xff]
    %v104 = vld [vmem:[#allocation2 + $0x278] sm:$0xff]
    %v105 = vld [vmem:[#allocation2 + $0x280] sm:$0xff]
    %v106 = vld [vmem:[#allocation2 + $0x288] sm:$0xff]
    %v107 = vld [vmem:[#allocation2 + $0x290] sm:$0xff]
    %v108 = vld [vmem:[#allocation2 + $0x298] sm:$0xff]
    %v109 = vld [vmem:[#allocation2 + $0x2a0] sm:$0xff]
    %v110 = vld [vmem:[#allocation2 + $0x2a8] sm:$0xff]
    %v111 = vld [vmem:[#allocation2 + $0x2b0] sm:$0xff]
    %v112 = vld [vmem:[#allocation2 + $0x2b8] sm:$0xff]
    %v113 = vld [vmem:[#allocation2 + $0x2c0] sm:$0xff]
    %v114 = vld [vmem:[#allocation2 + $0x2c8] sm:$0xff]
    %v115 = vld [vmem:[#allocation2 + $0x2d0] sm:$0xff]
    %v116 = vld [vmem:[#allocation2 + $0x2d8] sm:$0xff]
    %v117 = vld [vmem:[#allocation2 + $0x2e0] sm:$0xff]
    %v118 = vld [vmem:[#allocation2 + $0x2e8] sm:$0xff]
    %v119 = vld [vmem:[#allocation2 + $0x2f0] sm:$0xff]
    %v120 = vld [vmem:[#allocation2 + $0x2f8] sm:$0xff]
    %v121 = vld [vmem:[#allocation2 + $0x300] sm:$0xff]
    %v122 = vld [vmem:[#allocation2 + $0x308] sm:$0xff]
    %v123 = vld [vmem:[#allocation2 + $0x310] sm:$0xff]
    %v124 = vld [vmem:[#allocation2 + $0x318] sm:$0xff]
    %v125 = vld [vmem:[#allocation2 + $0x320] sm:$0xff]
    %v126 = vld [vmem:[#allocation2 + $0x328] sm:$0xff]
    %v127 = vld [vmem:[#allocation2 + $0x330] sm:$0xff]
    %v128 = vld [vmem:[#allocation2 + $0x338] sm:$0xff]
    %v129 = vld [vmem:[#allocation2 + $0x340] sm:$0xff]
    %v130 = vld [vmem:[#allocation2 + $0x348] sm:$0xff]
    %v131 = vld [vmem:[#allocation2 + $0x350] sm:$0xff]
    %v132 = vld [vmem:[#allocation2 + $0x358] sm:$0xff]
    %v133 = vld [vmem:[#allocation2 + $0x360] sm:$0xff]
    %v134 = vld [vmem:[#allocation2 + $0x368] sm:$0xff]
    %v135 = vld [vmem:[#allocation2 + $0x370] sm:$0xff]
    %v136 = vld [vmem:[#allocation2 + $0x378] sm:$0xff]
    %v137 = vld [vmem:[#allocation2 + $0x380] sm:$0xff]
    %v138 = vld [vmem:[#allocation2 + $0x388] sm:$0xff]
    %v139 = vld [vmem:[#allocation2 + $0x390] sm:$0xff]
    %v140 = vld [vmem:[#allocation2 + $0x398] sm:$0xff]
    %v141 = vld [vmem:[#allocation2 + $0x3a0] sm:$0xff]
    %v142 = vld [vmem:[#allocation2 + $0x3a8] sm:$0xff]
    %v143 = vld [vmem:[#allocation2 + $0x3b0] sm:$0xff]
    %v144 = vld [vmem:[#allocation2 + $0x3b8] sm:$0xff]
    %v145 = vld [vmem:[#allocation2 + $0x3c0] sm:$0xff]
    %v146 = vld [vmem:[#allocation2 + $0x3c8] sm:$0xff]
    %v147 = vld [vmem:[#allocation2 + $0x3d0] sm:$0xff]
    %v148 = vld [vmem:[#allocation2 + $0x3d8] sm:$0xff]
    %v149 = vld [vmem:[#allocation2 + $0x3e0] sm:$0xff]
    %v150 = vld [vmem:[#allocation2 + $0x3e8] sm:$0xff]
    %v151 = vld [vmem:[#allocation2 + $0x3f0] sm:$0xff]
    %v152 = vld [vmem:[#allocation2 + $0x3f8] sm:$0xff]
    %v153 = vld [vmem:[#allocation2 + $0x400] sm:$0xff]
    %v154 = vld [vmem:[#allocation2 + $0x408] sm:$0xff]
    %v155 = vld [vmem:[#allocation2 + $0x410] sm:$0xff]
    %v156 = vld [vmem:[#allocation2 + $0x418] sm:$0xff]
    %v157 = vld [vmem:[#allocation2 + $0x420] sm:$0xff]
    %v158 = vld [vmem:[#allocation2 + $0x428] sm:$0xff]
    %v159 = vld [vmem:[#allocation2 + $0x430] sm:$0xff]
    %v160 = vld [vmem:[#allocation2 + $0x438] sm:$0xff]
    %v161 = vld [vmem:[#allocation2 + $0x440] sm:$0xff]
    %v162 = vld [vmem:[#allocation2 + $0x448] sm:$0xff]
    %v163 = vld [vmem:[#allocation2 + $0x450] sm:$0xff]
    %v164 = vld [vmem:[#allocation2 + $0x458] sm:$0xff]
    %v165 = vld [vmem:[#allocation2 + $0x460] sm:$0xff]
    %v166 = vld [vmem:[#allocation2 + $0x468] sm:$0xff]
    %v167 = vld [vmem:[#allocation2 + $0x470] sm:$0xff]
    %v168 = vld [vmem:[#allocation2 + $0x478] sm:$0xff]
    %v169 = vld [vmem:[#allocation2 + $0x480] sm:$0xff]
    %v170 = vld [vmem:[#allocation2 + $0x488] sm:$0xff]
    %v171 = vld [vmem:[#allocation2 + $0x490] sm:$0xff]
    %v172 = vld [vmem:[#allocation2 + $0x498] sm:$0xff]
    %v173 = vld [vmem:[#allocation2 + $0x4a0] sm:$0xff]
    %v174 = vld [vmem:[#allocation2 + $0x4a8] sm:$0xff]
    %v175 = vld [vmem:[#allocation2 + $0x4b0] sm:$0xff]
    %v176 = vld [vmem:[#allocation2 + $0x4b8] sm:$0xff]
    %v177 = vld [vmem:[#allocation2 + $0x4c0] sm:$0xff]
    %v178 = vld [vmem:[#allocation2 + $0x4c8] sm:$0xff]
    %v179 = vld [vmem:[#allocation2 + $0x4d0] sm:$0xff]
    %v180 = vld [vmem:[#allocation2 + $0x4d8] sm:$0xff]
    %v181 = vld [vmem:[#allocation2 + $0x4e0] sm:$0xff]
    %v182 = vld [vmem:[#allocation2 + $0x4e8] sm:$0xff]
    %v183 = vld [vmem:[#allocation2 + $0x4f0] sm:$0xff]
    %v184 = vld [vmem:[#allocation2 + $0x4f8] sm:$0xff]
    %v185 = vld [vmem:[#allocation2 + $0x500] sm:$0xff]
    %v186 = vld [vmem:[#allocation2 + $0x508] sm:$0xff]
    %v187 = vld [vmem:[#allocation2 + $0x510] sm:$0xff]
    %v188 = vld [vmem:[#allocation2 + $0x518] sm:$0xff]
    %v189 = vld [vmem:[#allocation2 + $0x520] sm:$0xff]
    %v190 = vld [vmem:[#allocation2 + $0x528] sm:$0xff]
    %v191 = vld [vmem:[#allocation2 + $0x530] sm:$0xff]
    %v192 = vld [vmem:[#allocation2 + $0x538] sm:$0xff]
    %v193 = vld [vmem:[#allocation2 + $0x540] sm:$0xff]
    %v194 = vld [vmem:[#allocation2 + $0x548] sm:$0xff]
    %v195 = vld [vmem:[#allocation2 + $0x550] sm:$0xff]
    %v196 = vld [vmem:[#allocation2 + $0x558] sm:$0xff]
    %v197 = vld [vmem:[#allocation2 + $0x560] sm:$0xff]
    %v198 = vld [vmem:[#allocation2 + $0x568] sm:$0xff]
    %v199 = vld [vmem:[#allocation2 + $0x570] sm:$0xff]
    %v200 = vld [vmem:[#allocation2 + $0x578] sm:$0xff]
    %v201 = vld [vmem:[#allocation2 + $0x580] sm:$0xff]
    %v202 = vld [vmem:[#allocation2 + $0x588] sm:$0xff]
    %v203 = vld [vmem:[#allocation2 + $0x590] sm:$0xff]
    %v204 = vld [vmem:[#allocation2 + $0x598] sm:$0xff]
    %v205 = vld [vmem:[#allocation2 + $0x5a0] sm:$0xff]
    %v206 = vld [vmem:[#allocation2 + $0x5a8] sm:$0xff]
    %v207 = vld [vmem:[#allocation2 + $0x5b0] sm:$0xff]
    %v208 = vld [vmem:[#allocation2 + $0x5b8] sm:$0xff]
    %v209 = vld [vmem:[#allocation2 + $0x5c0] sm:$0xff]
    %v210 = vld [vmem:[#allocation2 + $0x5c8] sm:$0xff]
    %v211 = vld [vmem:[#allocation2 + $0x5d0] sm:$0xff]
    %v212 = vld [vmem:[#allocation2 + $0x5d8] sm:$0xff]
    %v213 = vld [vmem:[#allocation2 + $0x5e0] sm:$0xff]
    %v214 = vld [vmem:[#allocation2 + $0x5e8] sm:$0xff]
    %v215 = vld [vmem:[#allocation2 + $0x5f0] sm:$0xff]
    %v216 = vld [vmem:[#allocation2 + $0x5f8] sm:$0xff]
    %v217 = vld [vmem:[#allocation2 + $0x600] sm:$0xff]
    %v218 = vld [vmem:[#allocation2 + $0x608] sm:$0xff]
    %v219 = vld [vmem:[#allocation2 + $0x610] sm:$0xff]
    %v220 = vld [vmem:[#allocation2 + $0x618] sm:$0xff]
    %v221 = vld [vmem:[#allocation2 + $0x620] sm:$0xff]
    %v222 = vld [vmem:[#allocation2 + $0x628] sm:$0xff]
    %v223 = vld [vmem:[#allocation2 + $0x630] sm:$0xff]
    %v224 = vld [vmem:[#allocation2 + $0x638] sm:$0xff]
    %v225 = vld [vmem:[#allocation2 + $0x640] sm:$0xff]
    %v226 = vld [vmem:[#allocation2 + $0x648] sm:$0xff]
    %v227 = vld [vmem:[#allocation2 + $0x650] sm:$0xff]
    %v228 = vld [vmem:[#allocation2 + $0x658] sm:$0xff]
    %v229 = vld [vmem:[#allocation2 + $0x660] sm:$0xff]
    %v230 = vld [vmem:[#allocation2 + $0x668] sm:$0xff]
    %v231 = vld [vmem:[#allocation2 + $0x670] sm:$0xff]
    %v232 = vld [vmem:[#allocation2 + $0x678] sm:$0xff]
    %v233 = vld [vmem:[#allocation2 + $0x680] sm:$0xff]
    %v234 = vld [vmem:[#allocation2 + $0x688] sm:$0xff]
    %v235 = vld [vmem:[#allocation2 + $0x690] sm:$0xff]
    %v236 = vld [vmem:[#allocation2 + $0x698] sm:$0xff]
    %v237 = vld [vmem:[#allocation2 + $0x6a0] sm:$0xff]
    %v238 = vld [vmem:[#allocation2 + $0x6a8] sm:$0xff]
    %v239 = vld [vmem:[#allocation2 + $0x6b0] sm:$0xff]
    %v240 = vld [vmem:[#allocation2 + $0x6b8] sm:$0xff]
    %v241 = vld [vmem:[#allocation2 + $0x6c0] sm:$0xff]
    %v242 = vld [vmem:[#allocation2 + $0x6c8] sm:$0xff]
    %v243 = vld [vmem:[#allocation2 + $0x6d0] sm:$0xff]
    %v244 = vld [vmem:[#allocation2 + $0x6d8] sm:$0xff]
    %v245 = vld [vmem:[#allocation2 + $0x6e0] sm:$0xff]
    %v246 = vld [vmem:[#allocation2 + $0x6e8] sm:$0xff]
    %v247 = vld [vmem:[#allocation2 + $0x6f0] sm:$0xff]
    %v248 = vld [vmem:[#allocation2 + $0x6f8] sm:$0xff]
    %v249 = vld [vmem:[#allocation2 + $0x700] sm:$0xff]
    %v250 = vld [vmem:[#allocation2 + $0x708] sm:$0xff]
    %v251 = vld [vmem:[#allocation2 + $0x710] sm:$0xff]
    %v252 = vld [vmem:[#allocation2 + $0x718] sm:$0xff]
    %v253 = vld [vmem:[#allocation2 + $0x720] sm:$0xff]
    %v254 = vld [vmem:[#allocation2 + $0x728] sm:$0xff]
    %v255 = vld [vmem:[#allocation2 + $0x730] sm:$0xff]
    %v256 = vld [vmem:[#allocation2 + $0x738] sm:$0xff]
    %v257 = vld [vmem:[#allocation2 + $0x740] sm:$0xff]
    %v258 = vld [vmem:[#allocation2 + $0x748] sm:$0xff]
    %v259 = vld [vmem:[#allocation2 + $0x750] sm:$0xff]
    %v260 = vld [vmem:[#allocation2 + $0x758] sm:$0xff]
    %v261 = vld [vmem:[#allocation2 + $0x760] sm:$0xff]
    %v262 = vld [vmem:[#allocation2 + $0x768] sm:$0xff]
    %v263 = vld [vmem:[#allocation2 + $0x770] sm:$0xff]
    %v264 = vld [vmem:[#allocation2 + $0x778] sm:$0xff]
    %v265 = vld [vmem:[#allocation2 + $0x780] sm:$0xff]
    %v266 = vld [vmem:[#allocation2 + $0x788] sm:$0xff]
    %v267 = vld [vmem:[#allocation2 + $0x790] sm:$0xff]
    %v268 = vld [vmem:[#allocation2 + $0x798] sm:$0xff]
    %v269 = vld [vmem:[#allocation2 + $0x7a0] sm:$0xff]
    %v270 = vld [vmem:[#allocation2 + $0x7a8] sm:$0xff]
    %v271 = vld [vmem:[#allocation2 + $0x7b0] sm:$0xff]
    %v272 = vld [vmem:[#allocation2 + $0x7b8] sm:$0xff]
    %v273 = vld [vmem:[#allocation2 + $0x7c0] sm:$0xff]
    %v274 = vld [vmem:[#allocation2 + $0x7c8] sm:$0xff]
    %v275 = vld [vmem:[#allocation2 + $0x7d0] sm:$0xff]
    %v276 = vld [vmem:[#allocation2 + $0x7d8] sm:$0xff]
    %v277 = vld [vmem:[#allocation2 + $0x7e0] sm:$0xff]
    %v278 = vld [vmem:[#allocation2 + $0x7e8] sm:$0xff]
    %v279 = vld [vmem:[#allocation2 + $0x7f0] sm:$0xff]
    %v280 = vld [vmem:[#allocation2 + $0x7f8] sm:$0xff]
    %vm281 = vcmp.gt.f32.partialorder %v25, 0.0
    %vm282 = vcmp.gt.f32.partialorder %v26, 0.0
    %vm283 = vcmp.gt.f32.partialorder %v27, 0.0
    %vm284 = vcmp.gt.f32.partialorder %v28, 0.0
    %vm285 = vcmp.gt.f32.partialorder %v29, 0.0
    %vm286 = vcmp.gt.f32.partialorder %v30, 0.0
    %vm287 = vcmp.gt.f32.partialorder %v31, 0.0
    %vm288 = vcmp.gt.f32.partialorder %v32, 0.0
    %vm289 = vcmp.gt.f32.partialorder %v33, 0.0
    %vm290 = vcmp.gt.f32.partialorder %v34, 0.0
    %vm291 = vcmp.gt.f32.partialorder %v35, 0.0
    %vm292 = vcmp.gt.f32.partialorder %v36, 0.0
    %vm293 = vcmp.gt.f32.partialorder %v37, 0.0
    %vm294 = vcmp.gt.f32.partialorder %v38, 0.0
    %vm295 = vcmp.gt.f32.partialorder %v39, 0.0
    %vm296 = vcmp.gt.f32.partialorder %v40, 0.0
    %vm297 = vcmp.gt.f32.partialorder %v41, 0.0
    %vm298 = vcmp.gt.f32.partialorder %v42, 0.0
    %vm299 = vcmp.gt.f32.partialorder %v43, 0.0
    %vm300 = vcmp.gt.f32.partialorder %v44, 0.0
    %vm301 = vcmp.gt.f32.partialorder %v45, 0.0
    %vm302 = vcmp.gt.f32.partialorder %v46, 0.0
    %vm303 = vcmp.gt.f32.partialorder %v47, 0.0
    %vm304 = vcmp.gt.f32.partialorder %v48, 0.0
    %vm305 = vcmp.gt.f32.partialorder %v49, 0.0
    %vm306 = vcmp.gt.f32.partialorder %v50, 0.0
    %vm307 = vcmp.gt.f32.partialorder %v51, 0.0
    %vm308 = vcmp.gt.f32.partialorder %v52, 0.0
    %vm309 = vcmp.gt.f32.partialorder %v53, 0.0
    %vm310 = vcmp.gt.f32.partialorder %v54, 0.0
    %vm311 = vcmp.gt.f32.partialorder %v55, 0.0
    %vm312 = vcmp.gt.f32.partialorder %v56, 0.0
    %vm313 = vcmp.gt.f32.partialorder %v57, 0.0
    %vm314 = vcmp.gt.f32.partialorder %v58, 0.0
    %vm315 = vcmp.gt.f32.partialorder %v59, 0.0
    %vm316 = vcmp.gt.f32.partialorder %v60, 0.0
    %vm317 = vcmp.gt.f32.partialorder %v61, 0.0
    %vm318 = vcmp.gt.f32.partialorder %v62, 0.0
    %vm319 = vcmp.gt.f32.partialorder %v63, 0.0
    %vm320 = vcmp.gt.f32.partialorder %v64, 0.0
    %vm321 = vcmp.gt.f32.partialorder %v65, 0.0
    %vm322 = vcmp.gt.f32.partialorder %v66, 0.0
    %vm323 = vcmp.gt.f32.partialorder %v67, 0.0
    %vm324 = vcmp.gt.f32.partialorder %v68, 0.0
    %vm325 = vcmp.gt.f32.partialorder %v69, 0.0
    %vm326 = vcmp.gt.f32.partialorder %v70, 0.0
    %vm327 = vcmp.gt.f32.partialorder %v71, 0.0
    %vm328 = vcmp.gt.f32.partialorder %v72, 0.0
    %vm329 = vcmp.gt.f32.partialorder %v73, 0.0
    %vm330 = vcmp.gt.f32.partialorder %v74, 0.0
    %vm331 = vcmp.gt.f32.partialorder %v75, 0.0
    %vm332 = vcmp.gt.f32.partialorder %v76, 0.0
    %vm333 = vcmp.gt.f32.partialorder %v77, 0.0
    %vm334 = vcmp.gt.f32.partialorder %v78, 0.0
    %vm335 = vcmp.gt.f32.partialorder %v79, 0.0
    %vm336 = vcmp.gt.f32.partialorder %v80, 0.0
    %vm337 = vcmp.gt.f32.partialorder %v81, 0.0
    %vm338 = vcmp.gt.f32.partialorder %v82, 0.0
    %vm339 = vcmp.gt.f32.partialorder %v83, 0.0
    %vm340 = vcmp.gt.f32.partialorder %v84, 0.0
    %vm341 = vcmp.gt.f32.partialorder %v85, 0.0
    %vm342 = vcmp.gt.f32.partialorder %v86, 0.0
    %vm343 = vcmp.gt.f32.partialorder %v87, 0.0
    %vm344 = vcmp.gt.f32.partialorder %v88, 0.0
    %vm345 = vcmp.gt.f32.partialorder %v89, 0.0
    %vm346 = vcmp.gt.f32.partialorder %v90, 0.0
    %vm347 = vcmp.gt.f32.partialorder %v91, 0.0
    %vm348 = vcmp.gt.f32.partialorder %v92, 0.0
    %vm349 = vcmp.gt.f32.partialorder %v93, 0.0
    %vm350 = vcmp.gt.f32.partialorder %v94, 0.0
    %vm351 = vcmp.gt.f32.partialorder %v95, 0.0
    %vm352 = vcmp.gt.f32.partialorder %v96, 0.0
    %vm353 = vcmp.gt.f32.partialorder %v97, 0.0
    %vm354 = vcmp.gt.f32.partialorder %v98, 0.0
    %vm355 = vcmp.gt.f32.partialorder %v99, 0.0
    %vm356 = vcmp.gt.f32.partialorder %v100, 0.0
    %vm357 = vcmp.gt.f32.partialorder %v101, 0.0
    %vm358 = vcmp.gt.f32.partialorder %v102, 0.0
    %vm359 = vcmp.gt.f32.partialorder %v103, 0.0
    %vm360 = vcmp.gt.f32.partialorder %v104, 0.0
    %vm361 = vcmp.gt.f32.partialorder %v105, 0.0
    %vm362 = vcmp.gt.f32.partialorder %v106, 0.0
    %vm363 = vcmp.gt.f32.partialorder %v107, 0.0
    %vm364 = vcmp.gt.f32.partialorder %v108, 0.0
    %vm365 = vcmp.gt.f32.partialorder %v109, 0.0
    %vm366 = vcmp.gt.f32.partialorder %v110, 0.0
    %vm367 = vcmp.gt.f32.partialorder %v111, 0.0
    %vm368 = vcmp.gt.f32.partialorder %v112, 0.0
    %vm369 = vcmp.gt.f32.partialorder %v113, 0.0
    %vm370 = vcmp.gt.f32.partialorder %v114, 0.0
    %vm371 = vcmp.gt.f32.partialorder %v115, 0.0
    %vm372 = vcmp.gt.f32.partialorder %v116, 0.0
    %vm373 = vcmp.gt.f32.partialorder %v117, 0.0
    %vm374 = vcmp.gt.f32.partialorder %v118, 0.0
    %vm375 = vcmp.gt.f32.partialorder %v119, 0.0
    %vm376 = vcmp.gt.f32.partialorder %v120, 0.0
    %vm377 = vcmp.gt.f32.partialorder %v121, 0.0
    %vm378 = vcmp.gt.f32.partialorder %v122, 0.0
    %vm379 = vcmp.gt.f32.partialorder %v123, 0.0
    %vm380 = vcmp.gt.f32.partialorder %v124, 0.0
    %vm381 = vcmp.gt.f32.partialorder %v125, 0.0
    %vm382 = vcmp.gt.f32.partialorder %v126, 0.0
    %vm383 = vcmp.gt.f32.partialorder %v127, 0.0
    %vm384 = vcmp.gt.f32.partialorder %v128, 0.0
    %vm385 = vcmp.gt.f32.partialorder %v129, 0.0
    %vm386 = vcmp.gt.f32.partialorder %v130, 0.0
    %vm387 = vcmp.gt.f32.partialorder %v131, 0.0
    %vm388 = vcmp.gt.f32.partialorder %v132, 0.0
    %vm389 = vcmp.gt.f32.partialorder %v133, 0.0
    %vm390 = vcmp.gt.f32.partialorder %v134, 0.0
    %vm391 = vcmp.gt.f32.partialorder %v135, 0.0
    %vm392 = vcmp.gt.f32.partialorder %v136, 0.0
    %vm393 = vcmp.gt.f32.partialorder %v137, 0.0
    %vm394 = vcmp.gt.f32.partialorder %v138, 0.0
    %vm395 = vcmp.gt.f32.partialorder %v139, 0.0
    %vm396 = vcmp.gt.f32.partialorder %v140, 0.0
    %vm397 = vcmp.gt.f32.partialorder %v141, 0.0
    %vm398 = vcmp.gt.f32.partialorder %v142, 0.0
    %vm399 = vcmp.gt.f32.partialorder %v143, 0.0
    %vm400 = vcmp.gt.f32.partialorder %v144, 0.0
    %vm401 = vcmp.gt.f32.partialorder %v145, 0.0
    %vm402 = vcmp.gt.f32.partialorder %v146, 0.0
    %vm403 = vcmp.gt.f32.partialorder %v147, 0.0
    %vm404 = vcmp.gt.f32.partialorder %v148, 0.0
    %vm405 = vcmp.gt.f32.partialorder %v149, 0.0
    %vm406 = vcmp.gt.f32.partialorder %v150, 0.0
    %vm407 = vcmp.gt.f32.partialorder %v151, 0.0
    %vm408 = vcmp.gt.f32.partialorder %v152, 0.0
    %vm409 = vcmp.gt.f32.partialorder %v153, 0.0
    %vm410 = vcmp.gt.f32.partialorder %v154, 0.0
    %vm411 = vcmp.gt.f32.partialorder %v155, 0.0
    %vm412 = vcmp.gt.f32.partialorder %v156, 0.0
    %vm413 = vcmp.gt.f32.partialorder %v157, 0.0
    %vm414 = vcmp.gt.f32.partialorder %v158, 0.0
    %vm415 = vcmp.gt.f32.partialorder %v159, 0.0
    %vm416 = vcmp.gt.f32.partialorder %v160, 0.0
    %vm417 = vcmp.gt.f32.partialorder %v161, 0.0
    %vm418 = vcmp.gt.f32.partialorder %v162, 0.0
    %vm419 = vcmp.gt.f32.partialorder %v163, 0.0
    %vm420 = vcmp.gt.f32.partialorder %v164, 0.0
    %vm421 = vcmp.gt.f32.partialorder %v165, 0.0
    %vm422 = vcmp.gt.f32.partialorder %v166, 0.0
    %vm423 = vcmp.gt.f32.partialorder %v167, 0.0
    %vm424 = vcmp.gt.f32.partialorder %v168, 0.0
    %vm425 = vcmp.gt.f32.partialorder %v169, 0.0
    %vm426 = vcmp.gt.f32.partialorder %v170, 0.0
    %vm427 = vcmp.gt.f32.partialorder %v171, 0.0
    %vm428 = vcmp.gt.f32.partialorder %v172, 0.0
    %vm429 = vcmp.gt.f32.partialorder %v173, 0.0
    %vm430 = vcmp.gt.f32.partialorder %v174, 0.0
    %vm431 = vcmp.gt.f32.partialorder %v175, 0.0
    %vm432 = vcmp.gt.f32.partialorder %v176, 0.0
    %vm433 = vcmp.gt.f32.partialorder %v177, 0.0
    %vm434 = vcmp.gt.f32.partialorder %v178, 0.0
    %vm435 = vcmp.gt.f32.partialorder %v179, 0.0
    %vm436 = vcmp.gt.f32.partialorder %v180, 0.0
    %vm437 = vcmp.gt.f32.partialorder %v181, 0.0
    %vm438 = vcmp.gt.f32.partialorder %v182, 0.0
    %vm439 = vcmp.gt.f32.partialorder %v183, 0.0
    %vm440 = vcmp.gt.f32.partialorder %v184, 0.0
    %vm441 = vcmp.gt.f32.partialorder %v185, 0.0
    %vm442 = vcmp.gt.f32.partialorder %v186, 0.0
    %vm443 = vcmp.gt.f32.partialorder %v187, 0.0
    %vm444 = vcmp.gt.f32.partialorder %v188, 0.0
    %vm445 = vcmp.gt.f32.partialorder %v189, 0.0
    %vm446 = vcmp.gt.f32.partialorder %v190, 0.0
    %vm447 = vcmp.gt.f32.partialorder %v191, 0.0
    %vm448 = vcmp.gt.f32.partialorder %v192, 0.0
    %vm449 = vcmp.gt.f32.partialorder %v193, 0.0
    %vm450 = vcmp.gt.f32.partialorder %v194, 0.0
    %vm451 = vcmp.gt.f32.partialorder %v195, 0.0
    %vm452 = vcmp.gt.f32.partialorder %v196, 0.0
    %vm453 = vcmp.gt.f32.partialorder %v197, 0.0
    %vm454 = vcmp.gt.f32.partialorder %v198, 0.0
    %vm455 = vcmp.gt.f32.partialorder %v199, 0.0
    %vm456 = vcmp.gt.f32.partialorder %v200, 0.0
    %vm457 = vcmp.gt.f32.partialorder %v201, 0.0
    %vm458 = vcmp.gt.f32.partialorder %v202, 0.0
    %vm459 = vcmp.gt.f32.partialorder %v203, 0.0
    %vm460 = vcmp.gt.f32.partialorder %v204, 0.0
    %vm461 = vcmp.gt.f32.partialorder %v205, 0.0
    %vm462 = vcmp.gt.f32.partialorder %v206, 0.0
    %vm463 = vcmp.gt.f32.partialorder %v207, 0.0
    %vm464 = vcmp.gt.f32.partialorder %v208, 0.0
    %vm465 = vcmp.gt.f32.partialorder %v209, 0.0
    %vm466 = vcmp.gt.f32.partialorder %v210, 0.0
    %vm467 = vcmp.gt.f32.partialorder %v211, 0.0
    %vm468 = vcmp.gt.f32.partialorder %v212, 0.0
    %vm469 = vcmp.gt.f32.partialorder %v213, 0.0
    %vm470 = vcmp.gt.f32.partialorder %v214, 0.0
    %vm471 = vcmp.gt.f32.partialorder %v215, 0.0
    %vm472 = vcmp.gt.f32.partialorder %v216, 0.0
    %vm473 = vcmp.gt.f32.partialorder %v217, 0.0
    %vm474 = vcmp.gt.f32.partialorder %v218, 0.0
    %vm475 = vcmp.gt.f32.partialorder %v219, 0.0
    %vm476 = vcmp.gt.f32.partialorder %v220, 0.0
    %vm477 = vcmp.gt.f32.partialorder %v221, 0.0
    %vm478 = vcmp.gt.f32.partialorder %v222, 0.0
    %vm479 = vcmp.gt.f32.partialorder %v223, 0.0
    %vm480 = vcmp.gt.f32.partialorder %v224, 0.0
    %vm481 = vcmp.gt.f32.partialorder %v225, 0.0
    %vm482 = vcmp.gt.f32.partialorder %v226, 0.0
    %vm483 = vcmp.gt.f32.partialorder %v227, 0.0
    %vm484 = vcmp.gt.f32.partialorder %v228, 0.0
    %vm485 = vcmp.gt.f32.partialorder %v229, 0.0
    %vm486 = vcmp.gt.f32.partialorder %v230, 0.0
    %vm487 = vcmp.gt.f32.partialorder %v231, 0.0
    %vm488 = vcmp.gt.f32.partialorder %v232, 0.0
    %vm489 = vcmp.gt.f32.partialorder %v233, 0.0
    %vm490 = vcmp.gt.f32.partialorder %v234, 0.0
    %vm491 = vcmp.gt.f32.partialorder %v235, 0.0
    %vm492 = vcmp.gt.f32.partialorder %v236, 0.0
    %vm493 = vcmp.gt.f32.partialorder %v237, 0.0
    %vm494 = vcmp.gt.f32.partialorder %v238, 0.0
    %vm495 = vcmp.gt.f32.partialorder %v239, 0.0
    %vm496 = vcmp.gt.f32.partialorder %v240, 0.0
    %vm497 = vcmp.gt.f32.partialorder %v241, 0.0
    %vm498 = vcmp.gt.f32.partialorder %v242, 0.0
    %vm499 = vcmp.gt.f32.partialorder %v243, 0.0
    %vm500 = vcmp.gt.f32.partialorder %v244, 0.0
    %vm501 = vcmp.gt.f32.partialorder %v245, 0.0
    %vm502 = vcmp.gt.f32.partialorder %v246, 0.0
    %vm503 = vcmp.gt.f32.partialorder %v247, 0.0
    %vm504 = vcmp.gt.f32.partialorder %v248, 0.0
    %vm505 = vcmp.gt.f32.partialorder %v249, 0.0
    %vm506 = vcmp.gt.f32.partialorder %v250, 0.0
    %vm507 = vcmp.gt.f32.partialorder %v251, 0.0
    %vm508 = vcmp.gt.f32.partialorder %v252, 0.0
    %vm509 = vcmp.gt.f32.partialorder %v253, 0.0
    %vm510 = vcmp.gt.f32.partialorder %v254, 0.0
    %vm511 = vcmp.gt.f32.partialorder %v255, 0.0
    %vm512 = vcmp.gt.f32.partialorder %v256, 0.0
    %vm513 = vcmp.gt.f32.partialorder %v257, 0.0
    %vm514 = vcmp.gt.f32.partialorder %v258, 0.0
    %vm515 = vcmp.gt.f32.partialorder %v259, 0.0
    %vm516 = vcmp.gt.f32.partialorder %v260, 0.0
    %vm517 = vcmp.gt.f32.partialorder %v261, 0.0
    %vm518 = vcmp.gt.f32.partialorder %v262, 0.0
    %vm519 = vcmp.gt.f32.partialorder %v263, 0.0
    %vm520 = vcmp.gt.f32.partialorder %v264, 0.0
    %vm521 = vcmp.gt.f32.partialorder %v265, 0.0
    %vm522 = vcmp.gt.f32.partialorder %v266, 0.0
    %vm523 = vcmp.gt.f32.partialorder %v267, 0.0
    %vm524 = vcmp.gt.f32.partialorder %v268, 0.0
    %vm525 = vcmp.gt.f32.partialorder %v269, 0.0
    %vm526 = vcmp.gt.f32.partialorder %v270, 0.0
    %vm527 = vcmp.gt.f32.partialorder %v271, 0.0
    %vm528 = vcmp.gt.f32.partialorder %v272, 0.0
    %vm529 = vcmp.gt.f32.partialorder %v273, 0.0
    %vm530 = vcmp.gt.f32.partialorder %v274, 0.0
    %vm531 = vcmp.gt.f32.partialorder %v275, 0.0
    %vm532 = vcmp.gt.f32.partialorder %v276, 0.0
    %vm533 = vcmp.gt.f32.partialorder %v277, 0.0
    %vm534 = vcmp.gt.f32.partialorder %v278, 0.0
    %vm535 = vcmp.gt.f32.partialorder %v279, 0.0
    %vm536 = vcmp.gt.f32.partialorder %v280, 0.0
    %v537 = vsel %vm281, 1, 0
    %v538 = vsel %vm282, 1, 0
    %v539 = vsel %vm283, 1, 0
    %v540 = vsel %vm284, 1, 0
    %v541 = vsel %vm285, 1, 0
    %v542 = vsel %vm286, 1, 0
    %v543 = vsel %vm287, 1, 0
    %v544 = vsel %vm288, 1, 0
    %v545 = vsel %vm289, 1, 0
    %v546 = vsel %vm290, 1, 0
    %v547 = vsel %vm291, 1, 0
    %v548 = vsel %vm292, 1, 0
    %v549 = vsel %vm293, 1, 0
    %v550 = vsel %vm294, 1, 0
    %v551 = vsel %vm295, 1, 0
    %v552 = vsel %vm296, 1, 0
    %v553 = vsel %vm297, 1, 0
    %v554 = vsel %vm298, 1, 0
    %v555 = vsel %vm299, 1, 0
    %v556 = vsel %vm300, 1, 0
    %v557 = vsel %vm301, 1, 0
    %v558 = vsel %vm302, 1, 0
    %v559 = vsel %vm303, 1, 0
    %v560 = vsel %vm304, 1, 0
    %v561 = vsel %vm305, 1, 0
    %v562 = vsel %vm306, 1, 0
    %v563 = vsel %vm307, 1, 0
    %v564 = vsel %vm308, 1, 0
    %v565 = vsel %vm309, 1, 0
    %v566 = vsel %vm310, 1, 0
    %v567 = vsel %vm311, 1, 0
    %v568 = vsel %vm312, 1, 0
    %v569 = vsel %vm313, 1, 0
    %v570 = vsel %vm314, 1, 0
    %v571 = vsel %vm315, 1, 0
    %v572 = vsel %vm316, 1, 0
    %v573 = vsel %vm317, 1, 0
    %v574 = vsel %vm318, 1, 0
    %v575 = vsel %vm319, 1, 0
    %v576 = vsel %vm320, 1, 0
    %v577 = vsel %vm321, 1, 0
    %v578 = vsel %vm322, 1, 0
    %v579 = vsel %vm323, 1, 0
    %v580 = vsel %vm324, 1, 0
    %v581 = vsel %vm325, 1, 0
    %v582 = vsel %vm326, 1, 0
    %v583 = vsel %vm327, 1, 0
    %v584 = vsel %vm328, 1, 0
    %v585 = vsel %vm329, 1, 0
    %v586 = vsel %vm330, 1, 0
    %v587 = vsel %vm331, 1, 0
    %v588 = vsel %vm332, 1, 0
    %v589 = vsel %vm333, 1, 0
    %v590 = vsel %vm334, 1, 0
    %v591 = vsel %vm335, 1, 0
    %v592 = vsel %vm336, 1, 0
    %v593 = vsel %vm337, 1, 0
    %v594 = vsel %vm338, 1, 0
    %v595 = vsel %vm339, 1, 0
    %v596 = vsel %vm340, 1, 0
    %v597 = vsel %vm341, 1, 0
    %v598 = vsel %vm342, 1, 0
    %v599 = vsel %vm343, 1, 0
    %v600 = vsel %vm344, 1, 0
    %v601 = vsel %vm345, 1, 0
    %v602 = vsel %vm346, 1, 0
    %v603 = vsel %vm347, 1, 0
    %v604 = vsel %vm348, 1, 0
    %v605 = vsel %vm349, 1, 0
    %v606 = vsel %vm350, 1, 0
    %v607 = vsel %vm351, 1, 0
    %v608 = vsel %vm352, 1, 0
    %v609 = vsel %vm353, 1, 0
    %v610 = vsel %vm354, 1, 0
    %v611 = vsel %vm355, 1, 0
    %v612 = vsel %vm356, 1, 0
    %v613 = vsel %vm357, 1, 0
    %v614 = vsel %vm358, 1, 0
    %v615 = vsel %vm359, 1, 0
    %v616 = vsel %vm360, 1, 0
    %v617 = vsel %vm361, 1, 0
    %v618 = vsel %vm362, 1, 0
    %v619 = vsel %vm363, 1, 0
    %v620 = vsel %vm364, 1, 0
    %v621 = vsel %vm365, 1, 0
    %v622 = vsel %vm366, 1, 0
    %v623 = vsel %vm367, 1, 0
    %v624 = vsel %vm368, 1, 0
    %v625 = vsel %vm369, 1, 0
    %v626 = vsel %vm370, 1, 0
    %v627 = vsel %vm371, 1, 0
    %v628 = vsel %vm372, 1, 0
    %v629 = vsel %vm373, 1, 0
    %v630 = vsel %vm374, 1, 0
    %v631 = vsel %vm375, 1, 0
    %v632 = vsel %vm376, 1, 0
    %v633 = vsel %vm377, 1, 0
    %v634 = vsel %vm378, 1, 0
    %v635 = vsel %vm379, 1, 0
    %v636 = vsel %vm380, 1, 0
    %v637 = vsel %vm381, 1, 0
    %v638 = vsel %vm382, 1, 0
    %v639 = vsel %vm383, 1, 0
    %v640 = vsel %vm384, 1, 0
    %v641 = vsel %vm385, 1, 0
    %v642 = vsel %vm386, 1, 0
    %v643 = vsel %vm387, 1, 0
    %v644 = vsel %vm388, 1, 0
    %v645 = vsel %vm389, 1, 0
    %v646 = vsel %vm390, 1, 0
    %v647 = vsel %vm391, 1, 0
    %v648 = vsel %vm392, 1, 0
    %v649 = vsel %vm393, 1, 0
    %v650 = vsel %vm394, 1, 0
    %v651 = vsel %vm395, 1, 0
    %v652 = vsel %vm396, 1, 0
    %v653 = vsel %vm397, 1, 0
    %v654 = vsel %vm398, 1, 0
    %v655 = vsel %vm399, 1, 0
    %v656 = vsel %vm400, 1, 0
    %v657 = vsel %vm401, 1, 0
    %v658 = vsel %vm402, 1, 0
    %v659 = vsel %vm403, 1, 0
    %v660 = vsel %vm404, 1, 0
    %v661 = vsel %vm405, 1, 0
    %v662 = vsel %vm406, 1, 0
    %v663 = vsel %vm407, 1, 0
    %v664 = vsel %vm408, 1, 0
    %v665 = vsel %vm409, 1, 0
    %v666 = vsel %vm410, 1, 0
    %v667 = vsel %vm411, 1, 0
    %v668 = vsel %vm412, 1, 0
    %v669 = vsel %vm413, 1, 0
    %v670 = vsel %vm414, 1, 0
    %v671 = vsel %vm415, 1, 0
    %v672 = vsel %vm416, 1, 0
    %v673 = vsel %vm417, 1, 0
    %v674 = vsel %vm418, 1, 0
    %v675 = vsel %vm419, 1, 0
    %v676 = vsel %vm420, 1, 0
    %v677 = vsel %vm421, 1, 0
    %v678 = vsel %vm422, 1, 0
    %v679 = vsel %vm423, 1, 0
    %v680 = vsel %vm424, 1, 0
    %v681 = vsel %vm425, 1, 0
    %v682 = vsel %vm426, 1, 0
    %v683 = vsel %vm427, 1, 0
    %v684 = vsel %vm428, 1, 0
    %v685 = vsel %vm429, 1, 0
    %v686 = vsel %vm430, 1, 0
    %v687 = vsel %vm431, 1, 0
    %v688 = vsel %vm432, 1, 0
    %v689 = vsel %vm433, 1, 0
    %v690 = vsel %vm434, 1, 0
    %v691 = vsel %vm435, 1, 0
    %v692 = vsel %vm436, 1, 0
    %v693 = vsel %vm437, 1, 0
    %v694 = vsel %vm438, 1, 0
    %v695 = vsel %vm439, 1, 0
    %v696 = vsel %vm440, 1, 0
    %v697 = vsel %vm441, 1, 0
    %v698 = vsel %vm442, 1, 0
    %v699 = vsel %vm443, 1, 0
    %v700 = vsel %vm444, 1, 0
    %v701 = vsel %vm445, 1, 0
    %v702 = vsel %vm446, 1, 0
    %v703 = vsel %vm447, 1, 0
    %v704 = vsel %vm448, 1, 0
    %v705 = vsel %vm449, 1, 0
    %v706 = vsel %vm450, 1, 0
    %v707 = vsel %vm451, 1, 0
    %v708 = vsel %vm452, 1, 0
    %v709 = vsel %vm453, 1, 0
    %v710 = vsel %vm454, 1, 0
    %v711 = vsel %vm455, 1, 0
    %v712 = vsel %vm456, 1, 0
    %v713 = vsel %vm457, 1, 0
    %v714 = vsel %vm458, 1, 0
    %v715 = vsel %vm459, 1, 0
    %v716 = vsel %vm460, 1, 0
    %v717 = vsel %vm461, 1, 0
    %v718 = vsel %vm462, 1, 0
    %v719 = vsel %vm463, 1, 0
    %v720 = vsel %vm464, 1, 0
    %v721 = vsel %vm465, 1, 0
    %v722 = vsel %vm466, 1, 0
    %v723 = vsel %vm467, 1, 0
    %v724 = vsel %vm468, 1, 0
    %v725 = vsel %vm469, 1, 0
    %v726 = vsel %vm470, 1, 0
    %v727 = vsel %vm471, 1, 0
    %v728 = vsel %vm472, 1, 0
    %v729 = vsel %vm473, 1, 0
    %v730 = vsel %vm474, 1, 0
    %v731 = vsel %vm475, 1, 0
    %v732 = vsel %vm476, 1, 0
    %v733 = vsel %vm477, 1, 0
    %v734 = vsel %vm478, 1, 0
    %v735 = vsel %vm479, 1, 0
    %v736 = vsel %vm480, 1, 0
    %v737 = vsel %vm481, 1, 0
    %v738 = vsel %vm482, 1, 0
    %v739 = vsel %vm483, 1, 0
    %v740 = vsel %vm484, 1, 0
    %v741 = vsel %vm485, 1, 0
    %v742 = vsel %vm486, 1, 0
    %v743 = vsel %vm487, 1, 0
    %v744 = vsel %vm488, 1, 0
    %v745 = vsel %vm489, 1, 0
    %v746 = vsel %vm490, 1, 0
    %v747 = vsel %vm491, 1, 0
    %v748 = vsel %vm492, 1, 0
    %v749 = vsel %vm493, 1, 0
    %v750 = vsel %vm494, 1, 0
    %v751 = vsel %vm495, 1, 0
    %v752 = vsel %vm496, 1, 0
    %v753 = vsel %vm497, 1, 0
    %v754 = vsel %vm498, 1, 0
    %v755 = vsel %vm499, 1, 0
    %v756 = vsel %vm500, 1, 0
    %v757 = vsel %vm501, 1, 0
    %v758 = vsel %vm502, 1, 0
    %v759 = vsel %vm503, 1, 0
    %v760 = vsel %vm504, 1, 0
    %v761 = vsel %vm505, 1, 0
    %v762 = vsel %vm506, 1, 0
    %v763 = vsel %vm507, 1, 0
    %v764 = vsel %vm508, 1, 0
    %v765 = vsel %vm509, 1, 0
    %v766 = vsel %vm510, 1, 0
    %v767 = vsel %vm511, 1, 0
    %v768 = vsel %vm512, 1, 0
    %v769 = vsel %vm513, 1, 0
    %v770 = vsel %vm514, 1, 0
    %v771 = vsel %vm515, 1, 0
    %v772 = vsel %vm516, 1, 0
    %v773 = vsel %vm517, 1, 0
    %v774 = vsel %vm518, 1, 0
    %v775 = vsel %vm519, 1, 0
    %v776 = vsel %vm520, 1, 0
    %v777 = vsel %vm521, 1, 0
    %v778 = vsel %vm522, 1, 0
    %v779 = vsel %vm523, 1, 0
    %v780 = vsel %vm524, 1, 0
    %v781 = vsel %vm525, 1, 0
    %v782 = vsel %vm526, 1, 0
    %v783 = vsel %vm527, 1, 0
    %v784 = vsel %vm528, 1, 0
    %v785 = vsel %vm529, 1, 0
    %v786 = vsel %vm530, 1, 0
    %v787 = vsel %vm531, 1, 0
    %v788 = vsel %vm532, 1, 0
    %v789 = vsel %vm533, 1, 0
    %v790 = vsel %vm534, 1, 0
    %v791 = vsel %vm535, 1, 0
    %v792 = vsel %vm536, 1, 0
    %v793 = vcvt.s32.f32 %v537
    %v794 = vcvt.s32.f32 %v538
    %v795 = vcvt.s32.f32 %v539
    %v796 = vcvt.s32.f32 %v540
    %v797 = vcvt.s32.f32 %v541
    %v798 = vcvt.s32.f32 %v542
    %v799 = vcvt.s32.f32 %v543
    %v800 = vcvt.s32.f32 %v544
    %v801 = vcvt.s32.f32 %v545
    %v802 = vcvt.s32.f32 %v546
    %v803 = vcvt.s32.f32 %v547
    %v804 = vcvt.s32.f32 %v548
    %v805 = vcvt.s32.f32 %v549
    %v806 = vcvt.s32.f32 %v550
    %v807 = vcvt.s32.f32 %v551
    %v808 = vcvt.s32.f32 %v552
    %v809 = vcvt.s32.f32 %v553
    %v810 = vcvt.s32.f32 %v554
    %v811 = vcvt.s32.f32 %v555
    %v812 = vcvt.s32.f32 %v556
    %v813 = vcvt.s32.f32 %v557
    %v814 = vcvt.s32.f32 %v558
    %v815 = vcvt.s32.f32 %v559
    %v816 = vcvt.s32.f32 %v560
    %v817 = vcvt.s32.f32 %v561
    %v818 = vcvt.s32.f32 %v562
    %v819 = vcvt.s32.f32 %v563
    %v820 = vcvt.s32.f32 %v564
    %v821 = vcvt.s32.f32 %v565
    %v822 = vcvt.s32.f32 %v566
    %v823 = vcvt.s32.f32 %v567
    %v824 = vcvt.s32.f32 %v568
    %v825 = vcvt.s32.f32 %v569
    %v826 = vcvt.s32.f32 %v570
    %v827 = vcvt.s32.f32 %v571
    %v828 = vcvt.s32.f32 %v572
    %v829 = vcvt.s32.f32 %v573
    %v830 = vcvt.s32.f32 %v574
    %v831 = vcvt.s32.f32 %v575
    %v832 = vcvt.s32.f32 %v576
    %v833 = vcvt.s32.f32 %v577
    %v834 = vcvt.s32.f32 %v578
    %v835 = vcvt.s32.f32 %v579
    %v836 = vcvt.s32.f32 %v580
    %v837 = vcvt.s32.f32 %v581
    %v838 = vcvt.s32.f32 %v582
    %v839 = vcvt.s32.f32 %v583
    %v840 = vcvt.s32.f32 %v584
    %v841 = vcvt.s32.f32 %v585
    %v842 = vcvt.s32.f32 %v586
    %v843 = vcvt.s32.f32 %v587
    %v844 = vcvt.s32.f32 %v588
    %v845 = vcvt.s32.f32 %v589
    %v846 = vcvt.s32.f32 %v590
    %v847 = vcvt.s32.f32 %v591
    %v848 = vcvt.s32.f32 %v592
    %v849 = vcvt.s32.f32 %v593
    %v850 = vcvt.s32.f32 %v594
    %v851 = vcvt.s32.f32 %v595
    %v852 = vcvt.s32.f32 %v596
    %v853 = vcvt.s32.f32 %v597
    %v854 = vcvt.s32.f32 %v598
    %v855 = vcvt.s32.f32 %v599
    %v856 = vcvt.s32.f32 %v600
    %v857 = vcvt.s32.f32 %v601
    %v858 = vcvt.s32.f32 %v602
    %v859 = vcvt.s32.f32 %v603
    %v860 = vcvt.s32.f32 %v604
    %v861 = vcvt.s32.f32 %v605
    %v862 = vcvt.s32.f32 %v606
    %v863 = vcvt.s32.f32 %v607
    %v864 = vcvt.s32.f32 %v608
    %v865 = vcvt.s32.f32 %v609
    %v866 = vcvt.s32.f32 %v610
    %v867 = vcvt.s32.f32 %v611
    %v868 = vcvt.s32.f32 %v612
    %v869 = vcvt.s32.f32 %v613
    %v870 = vcvt.s32.f32 %v614
    %v871 = vcvt.s32.f32 %v615
    %v872 = vcvt.s32.f32 %v616
    %v873 = vcvt.s32.f32 %v617
    %v874 = vcvt.s32.f32 %v618
    %v875 = vcvt.s32.f32 %v619
    %v876 = vcvt.s32.f32 %v620
    %v877 = vcvt.s32.f32 %v621
    %v878 = vcvt.s32.f32 %v622
    %v879 = vcvt.s32.f32 %v623
    %v880 = vcvt.s32.f32 %v624
    %v881 = vcvt.s32.f32 %v625
    %v882 = vcvt.s32.f32 %v626
    %v883 = vcvt.s32.f32 %v627
    %v884 = vcvt.s32.f32 %v628
    %v885 = vcvt.s32.f32 %v629
    %v886 = vcvt.s32.f32 %v630
    %v887 = vcvt.s32.f32 %v631
    %v888 = vcvt.s32.f32 %v632
    %v889 = vcvt.s32.f32 %v633
    %v890 = vcvt.s32.f32 %v634
    %v891 = vcvt.s32.f32 %v635
    %v892 = vcvt.s32.f32 %v636
    %v893 = vcvt.s32.f32 %v637
    %v894 = vcvt.s32.f32 %v638
    %v895 = vcvt.s32.f32 %v639
    %v896 = vcvt.s32.f32 %v640
    %v897 = vcvt.s32.f32 %v641
    %v898 = vcvt.s32.f32 %v642
    %v899 = vcvt.s32.f32 %v643
    %v900 = vcvt.s32.f32 %v644
    %v901 = vcvt.s32.f32 %v645
    %v902 = vcvt.s32.f32 %v646
    %v903 = vcvt.s32.f32 %v647
    %v904 = vcvt.s32.f32 %v648
    %v905 = vcvt.s32.f32 %v649
    %v906 = vcvt.s32.f32 %v650
    %v907 = vcvt.s32.f32 %v651
    %v908 = vcvt.s32.f32 %v652
    %v909 = vcvt.s32.f32 %v653
    %v910 = vcvt.s32.f32 %v654
    %v911 = vcvt.s32.f32 %v655
    %v912 = vcvt.s32.f32 %v656
    %v913 = vcvt.s32.f32 %v657
    %v914 = vcvt.s32.f32 %v658
    %v915 = vcvt.s32.f32 %v659
    %v916 = vcvt.s32.f32 %v660
    %v917 = vcvt.s32.f32 %v661
    %v918 = vcvt.s32.f32 %v662
    %v919 = vcvt.s32.f32 %v663
    %v920 = vcvt.s32.f32 %v664
    %v921 = vcvt.s32.f32 %v665
    %v922 = vcvt.s32.f32 %v666
    %v923 = vcvt.s32.f32 %v667
    %v924 = vcvt.s32.f32 %v668
    %v925 = vcvt.s32.f32 %v669
    %v926 = vcvt.s32.f32 %v670
    %v927 = vcvt.s32.f32 %v671
    %v928 = vcvt.s32.f32 %v672
    %v929 = vcvt.s32.f32 %v673
    %v930 = vcvt.s32.f32 %v674
    %v931 = vcvt.s32.f32 %v675
    %v932 = vcvt.s32.f32 %v676
    %v933 = vcvt.s32.f32 %v677
    %v934 = vcvt.s32.f32 %v678
    %v935 = vcvt.s32.f32 %v679
    %v936 = vcvt.s32.f32 %v680
    %v937 = vcvt.s32.f32 %v681
    %v938 = vcvt.s32.f32 %v682
    %v939 = vcvt.s32.f32 %v683
    %v940 = vcvt.s32.f32 %v684
    %v941 = vcvt.s32.f32 %v685
    %v942 = vcvt.s32.f32 %v686
    %v943 = vcvt.s32.f32 %v687
    %v944 = vcvt.s32.f32 %v688
    %v945 = vcvt.s32.f32 %v689
    %v946 = vcvt.s32.f32 %v690
    %v947 = vcvt.s32.f32 %v691
    %v948 = vcvt.s32.f32 %v692
    %v949 = vcvt.s32.f32 %v693
    %v950 = vcvt.s32.f32 %v694
    %v951 = vcvt.s32.f32 %v695
    %v952 = vcvt.s32.f32 %v696
    %v953 = vcvt.s32.f32 %v697
    %v954 = vcvt.s32.f32 %v698
    %v955 = vcvt.s32.f32 %v699
    %v956 = vcvt.s32.f32 %v700
    %v957 = vcvt.s32.f32 %v701
    %v958 = vcvt.s32.f32 %v702
    %v959 = vcvt.s32.f32 %v703
    %v960 = vcvt.s32.f32 %v704
    %v961 = vcvt.s32.f32 %v705
    %v962 = vcvt.s32.f32 %v706
    %v963 = vcvt.s32.f32 %v707
    %v964 = vcvt.s32.f32 %v708
    %v965 = vcvt.s32.f32 %v709
    %v966 = vcvt.s32.f32 %v710
    %v967 = vcvt.s32.f32 %v711
    %v968 = vcvt.s32.f32 %v712
    %v969 = vcvt.s32.f32 %v713
    %v970 = vcvt.s32.f32 %v714
    %v971 = vcvt.s32.f32 %v715
    %v972 = vcvt.s32.f32 %v716
    %v973 = vcvt.s32.f32 %v717
    %v974 = vcvt.s32.f32 %v718
    %v975 = vcvt.s32.f32 %v719
    %v976 = vcvt.s32.f32 %v720
    %v977 = vcvt.s32.f32 %v721
    %v978 = vcvt.s32.f32 %v722
    %v979 = vcvt.s32.f32 %v723
    %v980 = vcvt.s32.f32 %v724
    %v981 = vcvt.s32.f32 %v725
    %v982 = vcvt.s32.f32 %v726
    %v983 = vcvt.s32.f32 %v727
    %v984 = vcvt.s32.f32 %v728
    %v985 = vcvt.s32.f32 %v729
    %v986 = vcvt.s32.f32 %v730
    %v987 = vcvt.s32.f32 %v731
    %v988 = vcvt.s32.f32 %v732
    %v989 = vcvt.s32.f32 %v733
    %v990 = vcvt.s32.f32 %v734
    %v991 = vcvt.s32.f32 %v735
    %v992 = vcvt.s32.f32 %v736
    %v993 = vcvt.s32.f32 %v737
    %v994 = vcvt.s32.f32 %v738
    %v995 = vcvt.s32.f32 %v739
    %v996 = vcvt.s32.f32 %v740
    %v997 = vcvt.s32.f32 %v741
    %v998 = vcvt.s32.f32 %v742
    %v999 = vcvt.s32.f32 %v743
    %v1000 = vcvt.s32.f32 %v744
    %v1001 = vcvt.s32.f32 %v745
    %v1002 = vcvt.s32.f32 %v746
    %v1003 = vcvt.s32.f32 %v747
    %v1004 = vcvt.s32.f32 %v748
    %v1005 = vcvt.s32.f32 %v749
    %v1006 = vcvt.s32.f32 %v750
    %v1007 = vcvt.s32.f32 %v751
    %v1008 = vcvt.s32.f32 %v752
    %v1009 = vcvt.s32.f32 %v753
    %v1010 = vcvt.s32.f32 %v754
    %v1011 = vcvt.s32.f32 %v755
    %v1012 = vcvt.s32.f32 %v756
    %v1013 = vcvt.s32.f32 %v757
    %v1014 = vcvt.s32.f32 %v758
    %v1015 = vcvt.s32.f32 %v759
    %v1016 = vcvt.s32.f32 %v760
    %v1017 = vcvt.s32.f32 %v761
    %v1018 = vcvt.s32.f32 %v762
    %v1019 = vcvt.s32.f32 %v763
    %v1020 = vcvt.s32.f32 %v764
    %v1021 = vcvt.s32.f32 %v765
    %v1022 = vcvt.s32.f32 %v766
    %v1023 = vcvt.s32.f32 %v767
    %v1024 = vcvt.s32.f32 %v768
    %v1025 = vcvt.s32.f32 %v769
    %v1026 = vcvt.s32.f32 %v770
    %v1027 = vcvt.s32.f32 %v771
    %v1028 = vcvt.s32.f32 %v772
    %v1029 = vcvt.s32.f32 %v773
    %v1030 = vcvt.s32.f32 %v774
    %v1031 = vcvt.s32.f32 %v775
    %v1032 = vcvt.s32.f32 %v776
    %v1033 = vcvt.s32.f32 %v777
    %v1034 = vcvt.s32.f32 %v778
    %v1035 = vcvt.s32.f32 %v779
    %v1036 = vcvt.s32.f32 %v780
    %v1037 = vcvt.s32.f32 %v781
    %v1038 = vcvt.s32.f32 %v782
    %v1039 = vcvt.s32.f32 %v783
    %v1040 = vcvt.s32.f32 %v784
    %v1041 = vcvt.s32.f32 %v785
    %v1042 = vcvt.s32.f32 %v786
    %v1043 = vcvt.s32.f32 %v787
    %v1044 = vcvt.s32.f32 %v788
    %v1045 = vcvt.s32.f32 %v789
    %v1046 = vcvt.s32.f32 %v790
    %v1047 = vcvt.s32.f32 %v791
    %v1048 = vcvt.s32.f32 %v792
    %1049 = vst [vmem:[#allocation5] sm:$0xff] %v793
    %1050 = vst [vmem:[#allocation5 + $0x8] sm:$0xff] %v794
    %1051 = vst [vmem:[#allocation5 + $0x10] sm:$0xff] %v795
    %1052 = vst [vmem:[#allocation5 + $0x18] sm:$0xff] %v796
    %1053 = vst [vmem:[#allocation5 + $0x20] sm:$0xff] %v797
    %1054 = vst [vmem:[#allocation5 + $0x28] sm:$0xff] %v798
    %1055 = vst [vmem:[#allocation5 + $0x30] sm:$0xff] %v799
    %1056 = vst [vmem:[#allocation5 + $0x38] sm:$0xff] %v800
    %1057 = vst [vmem:[#allocation5 + $0x40] sm:$0xff] %v801
    %1058 = vst [vmem:[#allocation5 + $0x48] sm:$0xff] %v802
    %1059 = vst [vmem:[#allocation5 + $0x50] sm:$0xff] %v803
    %1060 = vst [vmem:[#allocation5 + $0x58] sm:$0xff] %v804
    %1061 = vst [vmem:[#allocation5 + $0x60] sm:$0xff] %v805
    %1062 = vst [vmem:[#allocation5 + $0x68] sm:$0xff] %v806
    %1063 = vst [vmem:[#allocation5 + $0x70] sm:$0xff] %v807
    %1064 = vst [vmem:[#allocation5 + $0x78] sm:$0xff] %v808
    %1065 = vst [vmem:[#allocation5 + $0x80] sm:$0xff] %v809
    %1066 = vst [vmem:[#allocation5 + $0x88] sm:$0xff] %v810
    %1067 = vst [vmem:[#allocation5 + $0x90] sm:$0xff] %v811
    %1068 = vst [vmem:[#allocation5 + $0x98] sm:$0xff] %v812
    %1069 = vst [vmem:[#allocation5 + $0xa0] sm:$0xff] %v813
    %1070 = vst [vmem:[#allocation5 + $0xa8] sm:$0xff] %v814
    %1071 = vst [vmem:[#allocation5 + $0xb0] sm:$0xff] %v815
    %1072 = vst [vmem:[#allocation5 + $0xb8] sm:$0xff] %v816
    %1073 = vst [vmem:[#allocation5 + $0xc0] sm:$0xff] %v817
    %1074 = vst [vmem:[#allocation5 + $0xc8] sm:$0xff] %v818
    %1075 = vst [vmem:[#allocation5 + $0xd0] sm:$0xff] %v819
    %1076 = vst [vmem:[#allocation5 + $0xd8] sm:$0xff] %v820
    %1077 = vst [vmem:[#allocation5 + $0xe0] sm:$0xff] %v821
    %1078 = vst [vmem:[#allocation5 + $0xe8] sm:$0xff] %v822
    %1079 = vst [vmem:[#allocation5 + $0xf0] sm:$0xff] %v823
    %1080 = vst [vmem:[#allocation5 + $0xf8] sm:$0xff] %v824
    %1081 = vst [vmem:[#allocation5 + $0x100] sm:$0xff] %v825
    %1082 = vst [vmem:[#allocation5 + $0x108] sm:$0xff] %v826
    %1083 = vst [vmem:[#allocation5 + $0x110] sm:$0xff] %v827
    %1084 = vst [vmem:[#allocation5 + $0x118] sm:$0xff] %v828
    %1085 = vst [vmem:[#allocation5 + $0x120] sm:$0xff] %v829
    %1086 = vst [vmem:[#allocation5 + $0x128] sm:$0xff] %v830
    %1087 = vst [vmem:[#allocation5 + $0x130] sm:$0xff] %v831
    %1088 = vst [vmem:[#allocation5 + $0x138] sm:$0xff] %v832
    %1089 = vst [vmem:[#allocation5 + $0x140] sm:$0xff] %v833
    %1090 = vst [vmem:[#allocation5 + $0x148] sm:$0xff] %v834
    %1091 = vst [vmem:[#allocation5 + $0x150] sm:$0xff] %v835
    %1092 = vst [vmem:[#allocation5 + $0x158] sm:$0xff] %v836
    %1093 = vst [vmem:[#allocation5 + $0x160] sm:$0xff] %v837
    %1094 = vst [vmem:[#allocation5 + $0x168] sm:$0xff] %v838
    %1095 = vst [vmem:[#allocation5 + $0x170] sm:$0xff] %v839
    %1096 = vst [vmem:[#allocation5 + $0x178] sm:$0xff] %v840
    %1097 = vst [vmem:[#allocation5 + $0x180] sm:$0xff] %v841
    %1098 = vst [vmem:[#allocation5 + $0x188] sm:$0xff] %v842
    %1099 = vst [vmem:[#allocation5 + $0x190] sm:$0xff] %v843
    %1100 = vst [vmem:[#allocation5 + $0x198] sm:$0xff] %v844
    %1101 = vst [vmem:[#allocation5 + $0x1a0] sm:$0xff] %v845
    %1102 = vst [vmem:[#allocation5 + $0x1a8] sm:$0xff] %v846
    %1103 = vst [vmem:[#allocation5 + $0x1b0] sm:$0xff] %v847
    %1104 = vst [vmem:[#allocation5 + $0x1b8] sm:$0xff] %v848
    %1105 = vst [vmem:[#allocation5 + $0x1c0] sm:$0xff] %v849
    %1106 = vst [vmem:[#allocation5 + $0x1c8] sm:$0xff] %v850
    %1107 = vst [vmem:[#allocation5 + $0x1d0] sm:$0xff] %v851
    %1108 = vst [vmem:[#allocation5 + $0x1d8] sm:$0xff] %v852
    %1109 = vst [vmem:[#allocation5 + $0x1e0] sm:$0xff] %v853
    %1110 = vst [vmem:[#allocation5 + $0x1e8] sm:$0xff] %v854
    %1111 = vst [vmem:[#allocation5 + $0x1f0] sm:$0xff] %v855
    %1112 = vst [vmem:[#allocation5 + $0x1f8] sm:$0xff] %v856
    %1113 = vst [vmem:[#allocation5 + $0x200] sm:$0xff] %v857
    %1114 = vst [vmem:[#allocation5 + $0x208] sm:$0xff] %v858
    %1115 = vst [vmem:[#allocation5 + $0x210] sm:$0xff] %v859
    %1116 = vst [vmem:[#allocation5 + $0x218] sm:$0xff] %v860
    %1117 = vst [vmem:[#allocation5 + $0x220] sm:$0xff] %v861
    %1118 = vst [vmem:[#allocation5 + $0x228] sm:$0xff] %v862
    %1119 = vst [vmem:[#allocation5 + $0x230] sm:$0xff] %v863
    %1120 = vst [vmem:[#allocation5 + $0x238] sm:$0xff] %v864
    %1121 = vst [vmem:[#allocation5 + $0x240] sm:$0xff] %v865
    %1122 = vst [vmem:[#allocation5 + $0x248] sm:$0xff] %v866
    %1123 = vst [vmem:[#allocation5 + $0x250] sm:$0xff] %v867
    %1124 = vst [vmem:[#allocation5 + $0x258] sm:$0xff] %v868
    %1125 = vst [vmem:[#allocation5 + $0x260] sm:$0xff] %v869
    %1126 = vst [vmem:[#allocation5 + $0x268] sm:$0xff] %v870
    %1127 = vst [vmem:[#allocation5 + $0x270] sm:$0xff] %v871
    %1128 = vst [vmem:[#allocation5 + $0x278] sm:$0xff] %v872
    %1129 = vst [vmem:[#allocation5 + $0x280] sm:$0xff] %v873
    %1130 = vst [vmem:[#allocation5 + $0x288] sm:$0xff] %v874
    %1131 = vst [vmem:[#allocation5 + $0x290] sm:$0xff] %v875
    %1132 = vst [vmem:[#allocation5 + $0x298] sm:$0xff] %v876
    %1133 = vst [vmem:[#allocation5 + $0x2a0] sm:$0xff] %v877
    %1134 = vst [vmem:[#allocation5 + $0x2a8] sm:$0xff] %v878
    %1135 = vst [vmem:[#allocation5 + $0x2b0] sm:$0xff] %v879
    %1136 = vst [vmem:[#allocation5 + $0x2b8] sm:$0xff] %v880
    %1137 = vst [vmem:[#allocation5 + $0x2c0] sm:$0xff] %v881
    %1138 = vst [vmem:[#allocation5 + $0x2c8] sm:$0xff] %v882
    %1139 = vst [vmem:[#allocation5 + $0x2d0] sm:$0xff] %v883
    %1140 = vst [vmem:[#allocation5 + $0x2d8] sm:$0xff] %v884
    %1141 = vst [vmem:[#allocation5 + $0x2e0] sm:$0xff] %v885
    %1142 = vst [vmem:[#allocation5 + $0x2e8] sm:$0xff] %v886
    %1143 = vst [vmem:[#allocation5 + $0x2f0] sm:$0xff] %v887
    %1144 = vst [vmem:[#allocation5 + $0x2f8] sm:$0xff] %v888
    %1145 = vst [vmem:[#allocation5 + $0x300] sm:$0xff] %v889
    %1146 = vst [vmem:[#allocation5 + $0x308] sm:$0xff] %v890
    %1147 = vst [vmem:[#allocation5 + $0x310] sm:$0xff] %v891
    %1148 = vst [vmem:[#allocation5 + $0x318] sm:$0xff] %v892
    %1149 = vst [vmem:[#allocation5 + $0x320] sm:$0xff] %v893
    %1150 = vst [vmem:[#allocation5 + $0x328] sm:$0xff] %v894
    %1151 = vst [vmem:[#allocation5 + $0x330] sm:$0xff] %v895
    %1152 = vst [vmem:[#allocation5 + $0x338] sm:$0xff] %v896
    %1153 = vst [vmem:[#allocation5 + $0x340] sm:$0xff] %v897
    %1154 = vst [vmem:[#allocation5 + $0x348] sm:$0xff] %v898
    %1155 = vst [vmem:[#allocation5 + $0x350] sm:$0xff] %v899
    %1156 = vst [vmem:[#allocation5 + $0x358] sm:$0xff] %v900
    %1157 = vst [vmem:[#allocation5 + $0x360] sm:$0xff] %v901
    %1158 = vst [vmem:[#allocation5 + $0x368] sm:$0xff] %v902
    %1159 = vst [vmem:[#allocation5 + $0x370] sm:$0xff] %v903
    %1160 = vst [vmem:[#allocation5 + $0x378] sm:$0xff] %v904
    %1161 = vst [vmem:[#allocation5 + $0x380] sm:$0xff] %v905
    %1162 = vst [vmem:[#allocation5 + $0x388] sm:$0xff] %v906
    %1163 = vst [vmem:[#allocation5 + $0x390] sm:$0xff] %v907
    %1164 = vst [vmem:[#allocation5 + $0x398] sm:$0xff] %v908
    %1165 = vst [vmem:[#allocation5 + $0x3a0] sm:$0xff] %v909
    %1166 = vst [vmem:[#allocation5 + $0x3a8] sm:$0xff] %v910
    %1167 = vst [vmem:[#allocation5 + $0x3b0] sm:$0xff] %v911
    %1168 = vst [vmem:[#allocation5 + $0x3b8] sm:$0xff] %v912
    %1169 = vst [vmem:[#allocation5 + $0x3c0] sm:$0xff] %v913
    %1170 = vst [vmem:[#allocation5 + $0x3c8] sm:$0xff] %v914
    %1171 = vst [vmem:[#allocation5 + $0x3d0] sm:$0xff] %v915
    %1172 = vst [vmem:[#allocation5 + $0x3d8] sm:$0xff] %v916
    %1173 = vst [vmem:[#allocation5 + $0x3e0] sm:$0xff] %v917
    %1174 = vst [vmem:[#allocation5 + $0x3e8] sm:$0xff] %v918
    %1175 = vst [vmem:[#allocation5 + $0x3f0] sm:$0xff] %v919
    %1176 = vst [vmem:[#allocation5 + $0x3f8] sm:$0xff] %v920
    %1177 = vst [vmem:[#allocation5 + $0x400] sm:$0xff] %v921
    %1178 = vst [vmem:[#allocation5 + $0x408] sm:$0xff] %v922
    %1179 = vst [vmem:[#allocation5 + $0x410] sm:$0xff] %v923
    %1180 = vst [vmem:[#allocation5 + $0x418] sm:$0xff] %v924
    %1181 = vst [vmem:[#allocation5 + $0x420] sm:$0xff] %v925
    %1182 = vst [vmem:[#allocation5 + $0x428] sm:$0xff] %v926
    %1183 = vst [vmem:[#allocation5 + $0x430] sm:$0xff] %v927
    %1184 = vst [vmem:[#allocation5 + $0x438] sm:$0xff] %v928
    %1185 = vst [vmem:[#allocation5 + $0x440] sm:$0xff] %v929
    %1186 = vst [vmem:[#allocation5 + $0x448] sm:$0xff] %v930
    %1187 = vst [vmem:[#allocation5 + $0x450] sm:$0xff] %v931
    %1188 = vst [vmem:[#allocation5 + $0x458] sm:$0xff] %v932
    %1189 = vst [vmem:[#allocation5 + $0x460] sm:$0xff] %v933
    %1190 = vst [vmem:[#allocation5 + $0x468] sm:$0xff] %v934
    %1191 = vst [vmem:[#allocation5 + $0x470] sm:$0xff] %v935
    %1192 = vst [vmem:[#allocation5 + $0x478] sm:$0xff] %v936
    %1193 = vst [vmem:[#allocation5 + $0x480] sm:$0xff] %v937
    %1194 = vst [vmem:[#allocation5 + $0x488] sm:$0xff] %v938
    %1195 = vst [vmem:[#allocation5 + $0x490] sm:$0xff] %v939
    %1196 = vst [vmem:[#allocation5 + $0x498] sm:$0xff] %v940
    %1197 = vst [vmem:[#allocation5 + $0x4a0] sm:$0xff] %v941
    %1198 = vst [vmem:[#allocation5 + $0x4a8] sm:$0xff] %v942
    %1199 = vst [vmem:[#allocation5 + $0x4b0] sm:$0xff] %v943
    %1200 = vst [vmem:[#allocation5 + $0x4b8] sm:$0xff] %v944
    %1201 = vst [vmem:[#allocation5 + $0x4c0] sm:$0xff] %v945
    %1202 = vst [vmem:[#allocation5 + $0x4c8] sm:$0xff] %v946
    %1203 = vst [vmem:[#allocation5 + $0x4d0] sm:$0xff] %v947
    %1204 = vst [vmem:[#allocation5 + $0x4d8] sm:$0xff] %v948
    %1205 = vst [vmem:[#allocation5 + $0x4e0] sm:$0xff] %v949
    %1206 = vst [vmem:[#allocation5 + $0x4e8] sm:$0xff] %v950
    %1207 = vst [vmem:[#allocation5 + $0x4f0] sm:$0xff] %v951
    %1208 = vst [vmem:[#allocation5 + $0x4f8] sm:$0xff] %v952
    %1209 = vst [vmem:[#allocation5 + $0x500] sm:$0xff] %v953
    %1210 = vst [vmem:[#allocation5 + $0x508] sm:$0xff] %v954
    %1211 = vst [vmem:[#allocation5 + $0x510] sm:$0xff] %v955
    %1212 = vst [vmem:[#allocation5 + $0x518] sm:$0xff] %v956
    %1213 = vst [vmem:[#allocation5 + $0x520] sm:$0xff] %v957
    %1214 = vst [vmem:[#allocation5 + $0x528] sm:$0xff] %v958
    %1215 = vst [vmem:[#allocation5 + $0x530] sm:$0xff] %v959
    %1216 = vst [vmem:[#allocation5 + $0x538] sm:$0xff] %v960
    %1217 = vst [vmem:[#allocation5 + $0x540] sm:$0xff] %v961
    %1218 = vst [vmem:[#allocation5 + $0x548] sm:$0xff] %v962
    %1219 = vst [vmem:[#allocation5 + $0x550] sm:$0xff] %v963
    %1220 = vst [vmem:[#allocation5 + $0x558] sm:$0xff] %v964
    %1221 = vst [vmem:[#allocation5 + $0x560] sm:$0xff] %v965
    %1222 = vst [vmem:[#allocation5 + $0x568] sm:$0xff] %v966
    %1223 = vst [vmem:[#allocation5 + $0x570] sm:$0xff] %v967
    %1224 = vst [vmem:[#allocation5 + $0x578] sm:$0xff] %v968
    %1225 = vst [vmem:[#allocation5 + $0x580] sm:$0xff] %v969
    %1226 = vst [vmem:[#allocation5 + $0x588] sm:$0xff] %v970
    %1227 = vst [vmem:[#allocation5 + $0x590] sm:$0xff] %v971
    %1228 = vst [vmem:[#allocation5 + $0x598] sm:$0xff] %v972
    %1229 = vst [vmem:[#allocation5 + $0x5a0] sm:$0xff] %v973
    %1230 = vst [vmem:[#allocation5 + $0x5a8] sm:$0xff] %v974
    %1231 = vst [vmem:[#allocation5 + $0x5b0] sm:$0xff] %v975
    %1232 = vst [vmem:[#allocation5 + $0x5b8] sm:$0xff] %v976
    %1233 = vst [vmem:[#allocation5 + $0x5c0] sm:$0xff] %v977
    %1234 = vst [vmem:[#allocation5 + $0x5c8] sm:$0xff] %v978
    %1235 = vst [vmem:[#allocation5 + $0x5d0] sm:$0xff] %v979
    %1236 = vst [vmem:[#allocation5 + $0x5d8] sm:$0xff] %v980
    %1237 = vst [vmem:[#allocation5 + $0x5e0] sm:$0xff] %v981
    %1238 = vst [vmem:[#allocation5 + $0x5e8] sm:$0xff] %v982
    %1239 = vst [vmem:[#allocation5 + $0x5f0] sm:$0xff] %v983
    %1240 = vst [vmem:[#allocation5 + $0x5f8] sm:$0xff] %v984
    %1241 = vst [vmem:[#allocation5 + $0x600] sm:$0xff] %v985
    %1242 = vst [vmem:[#allocation5 + $0x608] sm:$0xff] %v986
    %1243 = vst [vmem:[#allocation5 + $0x610] sm:$0xff] %v987
    %1244 = vst [vmem:[#allocation5 + $0x618] sm:$0xff] %v988
    %1245 = vst [vmem:[#allocation5 + $0x620] sm:$0xff] %v989
    %1246 = vst [vmem:[#allocation5 + $0x628] sm:$0xff] %v990
    %1247 = vst [vmem:[#allocation5 + $0x630] sm:$0xff] %v991
    %1248 = vst [vmem:[#allocation5 + $0x638] sm:$0xff] %v992
    %1249 = vst [vmem:[#allocation5 + $0x640] sm:$0xff] %v993
    %1250 = vst [vmem:[#allocation5 + $0x648] sm:$0xff] %v994
    %1251 = vst [vmem:[#allocation5 + $0x650] sm:$0xff] %v995
    %1252 = vst [vmem:[#allocation5 + $0x658] sm:$0xff] %v996
    %1253 = vst [vmem:[#allocation5 + $0x660] sm:$0xff] %v997
    %1254 = vst [vmem:[#allocation5 + $0x668] sm:$0xff] %v998
    %1255 = vst [vmem:[#allocation5 + $0x670] sm:$0xff] %v999
    %1256 = vst [vmem:[#allocation5 + $0x678] sm:$0xff] %v1000
    %1257 = vst [vmem:[#allocation5 + $0x680] sm:$0xff] %v1001
    %1258 = vst [vmem:[#allocation5 + $0x688] sm:$0xff] %v1002
    %1259 = vst [vmem:[#allocation5 + $0x690] sm:$0xff] %v1003
    %1260 = vst [vmem:[#allocation5 + $0x698] sm:$0xff] %v1004
    %1261 = vst [vmem:[#allocation5 + $0x6a0] sm:$0xff] %v1005
    %1262 = vst [vmem:[#allocation5 + $0x6a8] sm:$0xff] %v1006
    %1263 = vst [vmem:[#allocation5 + $0x6b0] sm:$0xff] %v1007
    %1264 = vst [vmem:[#allocation5 + $0x6b8] sm:$0xff] %v1008
    %1265 = vst [vmem:[#allocation5 + $0x6c0] sm:$0xff] %v1009
    %1266 = vst [vmem:[#allocation5 + $0x6c8] sm:$0xff] %v1010
    %1267 = vst [vmem:[#allocation5 + $0x6d0] sm:$0xff] %v1011
    %1268 = vst [vmem:[#allocation5 + $0x6d8] sm:$0xff] %v1012
    %1269 = vst [vmem:[#allocation5 + $0x6e0] sm:$0xff] %v1013
    %1270 = vst [vmem:[#allocation5 + $0x6e8] sm:$0xff] %v1014
    %1271 = vst [vmem:[#allocation5 + $0x6f0] sm:$0xff] %v1015
    %1272 = vst [vmem:[#allocation5 + $0x6f8] sm:$0xff] %v1016
    %1273 = vst [vmem:[#allocation5 + $0x700] sm:$0xff] %v1017
    %1274 = vst [vmem:[#allocation5 + $0x708] sm:$0xff] %v1018
    %1275 = vst [vmem:[#allocation5 + $0x710] sm:$0xff] %v1019
    %1276 = vst [vmem:[#allocation5 + $0x718] sm:$0xff] %v1020
    %1277 = vst [vmem:[#allocation5 + $0x720] sm:$0xff] %v1021
    %1278 = vst [vmem:[#allocation5 + $0x728] sm:$0xff] %v1022
    %1279 = vst [vmem:[#allocation5 + $0x730] sm:$0xff] %v1023
    %1280 = vst [vmem:[#allocation5 + $0x738] sm:$0xff] %v1024
    %1281 = vst [vmem:[#allocation5 + $0x740] sm:$0xff] %v1025
    %1282 = vst [vmem:[#allocation5 + $0x748] sm:$0xff] %v1026
    %1283 = vst [vmem:[#allocation5 + $0x750] sm:$0xff] %v1027
    %1284 = vst [vmem:[#allocation5 + $0x758] sm:$0xff] %v1028
    %1285 = vst [vmem:[#allocation5 + $0x760] sm:$0xff] %v1029
    %1286 = vst [vmem:[#allocation5 + $0x768] sm:$0xff] %v1030
    %1287 = vst [vmem:[#allocation5 + $0x770] sm:$0xff] %v1031
    %1288 = vst [vmem:[#allocation5 + $0x778] sm:$0xff] %v1032
    %1289 = vst [vmem:[#allocation5 + $0x780] sm:$0xff] %v1033
    %1290 = vst [vmem:[#allocation5 + $0x788] sm:$0xff] %v1034
    %1291 = vst [vmem:[#allocation5 + $0x790] sm:$0xff] %v1035
    %1292 = vst [vmem:[#allocation5 + $0x798] sm:$0xff] %v1036
    %1293 = vst [vmem:[#allocation5 + $0x7a0] sm:$0xff] %v1037
    %1294 = vst [vmem:[#allocation5 + $0x7a8] sm:$0xff] %v1038
    %1295 = vst [vmem:[#allocation5 + $0x7b0] sm:$0xff] %v1039
    %1296 = vst [vmem:[#allocation5 + $0x7b8] sm:$0xff] %v1040
    %1297 = vst [vmem:[#allocation5 + $0x7c0] sm:$0xff] %v1041
    %1298 = vst [vmem:[#allocation5 + $0x7c8] sm:$0xff] %v1042
    %1299 = vst [vmem:[#allocation5 + $0x7d0] sm:$0xff] %v1043
    %1300 = vst [vmem:[#allocation5 + $0x7d8] sm:$0xff] %v1044
    %1301 = vst [vmem:[#allocation5 + $0x7e0] sm:$0xff] %v1045
    %1302 = vst [vmem:[#allocation5 + $0x7e8] sm:$0xff] %v1046
    %1303 = vst [vmem:[#allocation5 + $0x7f0] sm:$0xff] %v1047
    %1304 = vst [vmem:[#allocation5 + $0x7f8] sm:$0xff] %v1048
    // Predicated region
    $region10: #{tpu_custom_call.1} parent=1 // pred_check
      _
    $region11: #{tpu_custom_call.1} parent=1 // pred_check_branch
      %1306 = sbr.rel (0) target = $region13
    $region12: #{tpu_custom_call.1} parent=1 // pred_region
      %1308 = vsyncadd [#allocation4], 0
      %s1309 = sshll.u32 [#allocation5], 4
      %s1310 = int_to_ptr.vmem [resolvable:$true] %s1309
      %s1311 = sshll.u32 %s1, 4
      %s1312 = int_to_ptr.hbm [resolvable:$true] %s1311
      %1317 = dma.vmem_to_hbm [thread:$0]  %s1310, 32768, %s1312, [#allocation4], 1024, 1024, 64
    $region13: #{tpu_custom_call.1} parent=1 // pred_fallthru
      _
    // Predicated region
    $region14: #{tpu_custom_call.1} parent=1 // pred_check
      _
    $region15: #{tpu_custom_call.1} parent=1 // pred_check_branch
      %1319 = sbr.rel (0) target = $region17
    $region16: #{tpu_custom_call.1} parent=1 // pred_region
      %1321 = dma.done [#allocation4], 32768
    $region17: #{tpu_custom_call.1} parent=1 // pred_fallthru
      _
    %1322 = vsyncpa [#allocation3], 1
    %1323 = vsyncpa [#allocation4], 1

</llo_original>
